<compile_context>
chip_gen: v7x
topology: tpu7x:2x2x1
jax: 0.10.0
libtpu: 0.0.40
codegen_flags: <defaults>
</compile_context>

<pallas_src>
import functools

import jax
import jax.numpy as jnp
from jax import lax
from jax.experimental import pallas as pl
from jax.experimental.pallas import tpu as pltpu


# ------------------------------------------------------------------ kernel --

def _elu(x):
    # F.elu (alpha=1).
    return jnp.where(x > 0, x, jnp.exp(x) - 1.0)


def _attend_heads(xs, xd, w_src, w_dst, adj, *, heads, d):
    """PyG HANConv per-edge-type attention (dense masked-softmax form).

    xs   : [Ns, heads*d]  projected source features
    xd   : [Nd, heads*d]  projected destination features
    w_src: [heads, d]     lin_src attention vectors
    w_dst: [heads, d]     lin_dst attention vectors
    adj  : [Nd, Ns]       0/1 adjacency (adj[i, j] = 1  <=>  edge j -> i)
    returns list of per-head [Nd, d] outputs (relu'd messages).
    """
    has_edge = adj > 0
    nd = xd.shape[0]
    outs = []
    for h in range(heads):                                  # static, heads in {1, 2}
        xs_h = xs[:, h * d:(h + 1) * d]                     # [Ns, d]  static slice
        xd_h = xd[:, h * d:(h + 1) * d]                     # [Nd, d]
        w_src_h = w_src[h:h + 1, :]                         # [1, d]
        w_dst_h = w_dst[h:h + 1, :]                         # [1, d]

        # alpha_dst[i] = <x_dst[i], w_dst>      (VPU mul + lane reduce)
        a_dst = jnp.sum(xd_h * w_dst_h, axis=-1, keepdims=True)          # [Nd, 1]
        # alpha_src[j] broadcast over dst rows, computed directly as an MXU
        # A @ B^T matmul (avoids shipping/forming a transposed x_src copy).
        a_src = lax.dot_general(
            jnp.broadcast_to(w_src_h, (nd, d)), xs_h,
            dimension_numbers=(((1,), (1,)), ((), ())),
            preferred_element_type=jnp.float32)                          # [Nd, Ns]

        s = a_dst + a_src                                                # [Nd, Ns]
        s = jnp.maximum(s, 0.2 * s)                        # LeakyReLU(0.2)
        s = jnp.where(has_edge, s, jnp.float32(-1e30))     # mask non-edges
        m = jnp.max(s, axis=-1, keepdims=True)
        p = jnp.where(has_edge, jnp.exp(s - m), jnp.float32(0.0))
        denom = jnp.sum(p, axis=-1, keepdims=True)
        inv = jnp.where(denom > 0.0,
                        pl.reciprocal(denom, approx=True),
                        jnp.float32(0.0))                  # isolated dst -> 0 output
        msg = jnp.dot(p, xs_h, preferred_element_type=jnp.float32) * inv  # [Nd, d]
        # TODO(synk): attention dropout (p=0.2) applies only in training mode.
        outs.append(jnp.maximum(msg, 0.0))                 # F.relu after propagate
    return outs


def _han_fused_kernel(heads1, d1, heads2, d2,
                      x_bug_ref, x_user_ref, adj_ub_ref, adj_bu_ref,
                      w1b_ref, b1b_ref, w1u_ref, b1u_ref,
                      a1s_ub_ref, a1d_ub_ref, a1s_bu_ref, a1d_bu_ref,
                      w2b_ref, b2b_ref, w2u_ref, b2u_ref,
                      a2s_ub_ref, a2d_ub_ref,
                      wc_ref, bc_ref,
                      o_ref):
    adj_ub = adj_ub_ref[...]                               # [N_bug, N_user]
    adj_bu = adj_bu_ref[...]                               # [N_user, N_bug]

    # ---- HANConv layer 1: per-node-type projection  x @ W^T + b -> [N, H1*D1]
    h_bug = jnp.dot(x_bug_ref[...], w1b_ref[...],
                    preferred_element_type=jnp.float32) + b1b_ref[...]
    h_user = jnp.dot(x_user_ref[...], w1u_ref[...],
                     preferred_element_type=jnp.float32) + b1u_ref[...]

    # ---- HANConv layer 1: per-edge-type attention (semantic group() == identity)
    bug_heads = _attend_heads(h_user, h_bug, a1s_ub_ref[...], a1d_ub_ref[...],
                              adj_ub, heads=heads1, d=d1)      # dst = bug
    user_heads = _attend_heads(h_bug, h_user, a1s_bu_ref[...], a1d_bu_ref[...],
                               adj_bu, heads=heads1, d=d1)     # dst = user

    # ---- inter-layer F.elu + layer-2 projection.
    # concat(heads) @ W2^T  ==  sum_h head_h @ W2^T[h*D1:(h+1)*D1, :]
    w2b = w2b_ref[...]
    w2u = w2u_ref[...]
    g_bug = b2b_ref[...]
    g_user = b2u_ref[...]
    for h in range(heads1):
        g_bug = g_bug + jnp.dot(_elu(bug_heads[h]),
                                w2b[h * d1:(h + 1) * d1, :],
                                preferred_element_type=jnp.float32)
        g_user = g_user + jnp.dot(_elu(user_heads[h]),
                                  w2u[h * d1:(h + 1) * d1, :],
                                  preferred_element_type=jnp.float32)

    # ---- HANConv layer 2 attention: only the 'bug' output feeds the classifier.
    z_heads = _attend_heads(g_user, g_bug, a2s_ub_ref[...], a2d_ub_ref[...],
                            adj_ub, heads=heads2, d=d2)

    # ---- classifier:  concat(z_heads) @ Wc^T + bc
    wc = wc_ref[...]
    logits = bc_ref[...]
    for h in range(heads2):
        logits = logits + jnp.dot(z_heads[h],
                                  wc[h * d2:(h + 1) * d2, :],
                                  preferred_element_type=jnp.float32)
    o_ref[...] = logits


# ----------------------------------------------------------------- wrapper --

@jax.jit
def han_forward(params, x_bug, x_user, adj_user_to_bug):
    """Full HAN forward.  adj_user_to_bug: [N_bug, N_user] 0/1 (edge user->bug)."""
    f32 = jnp.float32
    p1, p2, cls = params["han1"], params["han2"], params["cls"]

    heads1, d1 = p1["lin_src"]["user__interacts__bug"].shape
    heads2, d2 = p2["lin_src"]["user__interacts__bug"].shape
    n_bug = x_bug.shape[0]
    n_cls = cls["w"].shape[0]

    adj_ub = adj_user_to_bug.astype(f32)
    adj_bu = adj_ub.T

    args = (
        x_bug.astype(f32), x_user.astype(f32), adj_ub, adj_bu,
        # layer 1 projections (W pre-transposed so kernel does x @ W^T directly)
        p1["proj"]["bug"]["w"].T.astype(f32),
        p1["proj"]["bug"]["b"].reshape(1, -1).astype(f32),
        p1["proj"]["user"]["w"].T.astype(f32),
        p1["proj"]["user"]["b"].reshape(1, -1).astype(f32),
        # layer 1 attention vectors
        p1["lin_src"]["user__interacts__bug"].astype(f32),
        p1["lin_dst"]["user__interacts__bug"].astype(f32),
        p1["lin_src"]["bug__interacts__user"].astype(f32),
        p1["lin_dst"]["bug__interacts__user"].astype(f32),
        # layer 2 projections
        p2["proj"]["bug"]["w"].T.astype(f32),
        p2["proj"]["bug"]["b"].reshape(1, -1).astype(f32),
        p2["proj"]["user"]["w"].T.astype(f32),
        p2["proj"]["user"]["b"].reshape(1, -1).astype(f32),
        # layer 2 attention vectors (only dst='bug' is consumed downstream)
        p2["lin_src"]["user__interacts__bug"].astype(f32),
        p2["lin_dst"]["user__interacts__bug"].astype(f32),
        # classifier
        cls["w"].T.astype(f32),
        cls["b"].reshape(1, -1).astype(f32),
    )

    kernel = functools.partial(_han_fused_kernel, heads1, d1, heads2, d2)
    vmem = pl.BlockSpec(memory_space=pltpu.MemorySpace.VMEM)
    return pl.pallas_call(
        kernel,
        out_shape=jax.ShapeDtypeStruct((n_bug, n_cls), f32),
        in_specs=[vmem] * len(args),
        out_specs=vmem,
    )(*args)


# --------------------------------------------------- pure-JAX reference -----

def _reference_forward(params, x_bug, x_user, adj_ub):
    adj_bu = adj_ub.T

    def lin(x, w, b):
        return x @ w.T + b

    def attend(xs, xd, w_src, w_dst, adj):
        heads, d = w_src.shape
        has = adj > 0
        outs = []
        for h in range(heads):
            xs_h = xs[:, h * d:(h + 1) * d]
            xd_h = xd[:, h * d:(h + 1) * d]
            s = (xd_h @ w_dst[h])[:, None] + (xs_h @ w_src[h])[None, :]
            s = jnp.where(s > 0, s, 0.2 * s)
            s = jnp.where(has, s, -1e30)
            m = jnp.max(s, axis=-1, keepdims=True)
            p = jnp.where(has, jnp.exp(s - m), 0.0)
            den = jnp.sum(p, axis=-1, keepdims=True)
            p = jnp.where(den > 0, p / jnp.maximum(den, 1e-30), 0.0)
            outs.append(jax.nn.relu(p @ xs_h))
        return jnp.concatenate(outs, axis=-1) if heads > 1 else outs[0]

    p1, p2, cls = params["han1"], params["han2"], params["cls"]
    hb = lin(x_bug, p1["proj"]["bug"]["w"], p1["proj"]["bug"]["b"])
    hu = lin(x_user, p1["proj"]["user"]["w"], p1["proj"]["user"]["b"])
    ob = attend(hu, hb, p1["lin_src"]["user__interacts__bug"],
                p1["lin_dst"]["user__interacts__bug"], adj_ub)
    ou = attend(hb, hu, p1["lin_src"]["bug__interacts__user"],
                p1["lin_dst"]["bug__interacts__user"], adj_bu)
    ob, ou = jax.nn.elu(ob), jax.nn.elu(ou)
    gb = lin(ob, p2["proj"]["bug"]["w"], p2["proj"]["bug"]["b"])
    gu = lin(ou, p2["proj"]["user"]["w"], p2["proj"]["user"]["b"])
    zb = attend(gu, gb, p2["lin_src"]["user__interacts__bug"],
                p2["lin_dst"]["user__interacts__bug"], adj_ub)
    return lin(zb, cls["w"], cls["b"])


# ------------------------------------------------------------------ params --

def init_han_conv_params(key, in_dim, out_ch, heads, node_types, edge_types):
    D = out_ch // heads
    params = {"proj": {}, "lin_src": {}, "lin_dst": {}}
    for nt in node_types:
        key, k1, k2 = jax.random.split(key, 3)
        params["proj"][nt] = {
            "w": jax.random.normal(k1, (out_ch, in_dim), jnp.float32) * 0.2,
            "b": jax.random.normal(k2, (out_ch,), jnp.float32) * 0.1,
        }
    for et in edge_types:
        key, k1, k2 = jax.random.split(key, 3)
        name = "__".join(et)
        params["lin_src"][name] = jax.random.normal(k1, (heads, D), jnp.float32) * 0.2
        params["lin_dst"][name] = jax.random.normal(k2, (heads, D), jnp.float32) * 0.2
    return params, key


# -------------------------------------------------------------------- main --

if __name__ == "__main__":
    N_BUG, N_USER = 12, 8
    IN_DIM, HIDDEN_DIM, OUT_DIM = 16, 32, 16          # HIDDEN_DIM % heads == 0
    HEADS = 2
    NUM_ASSIGNEES = 5

    node_types = ["bug", "user"]
    edge_types = [("bug", "interacts", "user"), ("user", "interacts", "bug")]

    key = jax.random.PRNGKey(0)
    key, kx_b, kx_u, k_adj = jax.random.split(key, 4)

    x_bug = jax.random.normal(kx_b, (N_BUG, IN_DIM), jnp.float32)
    x_user = jax.random.normal(kx_u, (N_USER, IN_DIM), jnp.float32)

    # Bipartite bug<->user interaction edges (symmetric, as produced by
    # to_hetero on a bidirectional edge list).  adj[i, j] = 1 <=> user j -> bug i.
    adj_user_to_bug = (jax.random.uniform(k_adj, (N_BUG, N_USER)) < 0.4
                       ).astype(jnp.float32)

    han1_params, key = init_han_conv_params(key, IN_DIM, HIDDEN_DIM, HEADS,
                                            node_types, edge_types)
    han2_params, key = init_han_conv_params(key, HIDDEN_DIM, OUT_DIM, 1,
                                            node_types, edge_types)
    key, kcw, kcb = jax.random.split(key, 3)
    params = {
        "han1": han1_params,
        "han2": han2_params,
        "cls": {
            "w": jax.random.normal(kcw, (NUM_ASSIGNEES, OUT_DIM), jnp.float32) * 0.2,
            "b": jax.random.normal(kcb, (NUM_ASSIGNEES,), jnp.float32) * 0.1,
        },
    }

    logits = han_forward(params, x_bug, x_user, adj_user_to_bug)
    logits = jax.block_until_ready(logits)

    assert logits.shape == (N_BUG, NUM_ASSIGNEES), logits.shape
    assert bool(jnp.all(jnp.isfinite(logits)))

    ref = _reference_forward(params, x_bug, x_user, adj_user_to_bug)
    max_err = float(jnp.max(jnp.abs(logits - ref)))
    scale = 1.0 + float(jnp.max(jnp.abs(ref)))
    assert max_err <= 5e-2 * scale, (max_err, scale)   # approx-recip tolerance

    print("KERNEL_OK")
</pallas_src>

<mosaic_0001>
module attributes {stable_mosaic.version = 11 : i64} {
  func.func @_han_fused_kernel(%arg0: memref<12x16xf32, #tpu.memory_space<vmem>>, %arg1: memref<8x16xf32, #tpu.memory_space<vmem>>, %arg2: memref<12x8xf32, #tpu.memory_space<vmem>>, %arg3: memref<8x12xf32, #tpu.memory_space<vmem>>, %arg4: memref<16x32xf32, #tpu.memory_space<vmem>>, %arg5: memref<1x32xf32, #tpu.memory_space<vmem>>, %arg6: memref<16x32xf32, #tpu.memory_space<vmem>>, %arg7: memref<1x32xf32, #tpu.memory_space<vmem>>, %arg8: memref<2x16xf32, #tpu.memory_space<vmem>>, %arg9: memref<2x16xf32, #tpu.memory_space<vmem>>, %arg10: memref<2x16xf32, #tpu.memory_space<vmem>>, %arg11: memref<2x16xf32, #tpu.memory_space<vmem>>, %arg12: memref<32x16xf32, #tpu.memory_space<vmem>>, %arg13: memref<1x16xf32, #tpu.memory_space<vmem>>, %arg14: memref<32x16xf32, #tpu.memory_space<vmem>>, %arg15: memref<1x16xf32, #tpu.memory_space<vmem>>, %arg16: memref<1x16xf32, #tpu.memory_space<vmem>>, %arg17: memref<1x16xf32, #tpu.memory_space<vmem>>, %arg18: memref<16x5xf32, #tpu.memory_space<vmem>>, %arg19: memref<1x5xf32, #tpu.memory_space<vmem>>, %arg20: memref<12x5xf32, #tpu.memory_space<vmem>>) attributes {dimension_semantics = [], scalar_prefetch = 0 : i64, scratch_operands = 0 : i64, tpu.core_type = #tpu.core_type<tc>} {
    %c0 = arith.constant 0 : index
    %c0_0 = arith.constant 0 : index
    %0 = vector.load %arg2[%c0, %c0_0] : memref<12x8xf32, #tpu.memory_space<vmem>>, vector<12x8xf32>
    %c0_1 = arith.constant 0 : index
    %c0_2 = arith.constant 0 : index
    %1 = vector.load %arg3[%c0_1, %c0_2] : memref<8x12xf32, #tpu.memory_space<vmem>>, vector<8x12xf32>
    %c0_3 = arith.constant 0 : index
    %c0_4 = arith.constant 0 : index
    %2 = vector.load %arg0[%c0_3, %c0_4] : memref<12x16xf32, #tpu.memory_space<vmem>>, vector<12x16xf32>
    %c0_5 = arith.constant 0 : index
    %c0_6 = arith.constant 0 : index
    %3 = vector.load %arg4[%c0_5, %c0_6] : memref<16x32xf32, #tpu.memory_space<vmem>>, vector<16x32xf32>
    %cst = arith.constant dense<0.000000e+00> : vector<12x32xf32>
    %4 = tpu.matmul %2, %3, %cst {dimension_numbers = #tpu.dot_dimension_numbers<[1], [0], [0], [1], [0, 0, 1, 1], [], []>} : vector<12x16xf32>, vector<16x32xf32>, vector<12x32xf32> -> vector<12x32xf32>
    %c0_7 = arith.constant 0 : index
    %c0_8 = arith.constant 0 : index
    %5 = vector.load %arg5[%c0_7, %c0_8] : memref<1x32xf32, #tpu.memory_space<vmem>>, vector<1x32xf32>
    %6 = vector.broadcast %5 : vector<1x32xf32> to vector<12x32xf32>
    %7 = arith.addf %4, %6 : vector<12x32xf32>
    %c0_9 = arith.constant 0 : index
    %c0_10 = arith.constant 0 : index
    %8 = vector.load %arg1[%c0_9, %c0_10] : memref<8x16xf32, #tpu.memory_space<vmem>>, vector<8x16xf32>
    %c0_11 = arith.constant 0 : index
    %c0_12 = arith.constant 0 : index
    %9 = vector.load %arg6[%c0_11, %c0_12] : memref<16x32xf32, #tpu.memory_space<vmem>>, vector<16x32xf32>
    %cst_13 = arith.constant dense<0.000000e+00> : vector<8x32xf32>
    %10 = tpu.matmul %8, %9, %cst_13 {dimension_numbers = #tpu.dot_dimension_numbers<[1], [0], [0], [1], [0, 0, 1, 1], [], []>} : vector<8x16xf32>, vector<16x32xf32>, vector<8x32xf32> -> vector<8x32xf32>
    %c0_14 = arith.constant 0 : index
    %c0_15 = arith.constant 0 : index
    %11 = vector.load %arg7[%c0_14, %c0_15] : memref<1x32xf32, #tpu.memory_space<vmem>>, vector<1x32xf32>
    %12 = vector.broadcast %11 : vector<1x32xf32> to vector<8x32xf32>
    %13 = arith.addf %10, %12 : vector<8x32xf32>
    %c0_16 = arith.constant 0 : index
    %c0_17 = arith.constant 0 : index
    %14 = vector.load %arg8[%c0_16, %c0_17] : memref<2x16xf32, #tpu.memory_space<vmem>>, vector<2x16xf32>
    %c0_18 = arith.constant 0 : index
    %c0_19 = arith.constant 0 : index
    %15 = vector.load %arg9[%c0_18, %c0_19] : memref<2x16xf32, #tpu.memory_space<vmem>>, vector<2x16xf32>
    %cst_20 = arith.constant 0.000000e+00 : f32
    %16 = vector.broadcast %cst_20 : f32 to vector<12x8xf32>
    %17 = arith.cmpf ogt, %0, %16 : vector<12x8xf32>
    %18 = vector.extract_strided_slice %13 {offsets = [0, 0], sizes = [8, 16], strides = [1, 1]} : vector<8x32xf32> to vector<8x16xf32>
    %19 = vector.extract_strided_slice %7 {offsets = [0, 0], sizes = [12, 16], strides = [1, 1]} : vector<12x32xf32> to vector<12x16xf32>
    %20 = vector.extract_strided_slice %14 {offsets = [0, 0], sizes = [1, 16], strides = [1, 1]} : vector<2x16xf32> to vector<1x16xf32>
    %21 = vector.extract_strided_slice %15 {offsets = [0, 0], sizes = [1, 16], strides = [1, 1]} : vector<2x16xf32> to vector<1x16xf32>
    %22 = vector.broadcast %21 : vector<1x16xf32> to vector<12x16xf32>
    %23 = arith.mulf %19, %22 : vector<12x16xf32>
    %cst_21 = arith.constant dense<0.000000e+00> : vector<12xf32>
    %24 = vector.multi_reduction <add>, %23, %cst_21 [1] : vector<12x16xf32> to vector<12xf32>
    %25 = vector.shape_cast %24 : vector<12xf32> to vector<12x1xf32>
    %26 = vector.shape_cast %20 : vector<1x16xf32> to vector<1x16xf32>
    %27 = vector.broadcast %26 : vector<1x16xf32> to vector<12x16xf32>
    %cst_22 = arith.constant dense<0.000000e+00> : vector<12x8xf32>
    %28 = tpu.matmul %27, %18, %cst_22 {dimension_numbers = #tpu.dot_dimension_numbers<[1], [1], [0], [0], [0, 0, 1, 0], [], []>} : vector<12x16xf32>, vector<8x16xf32>, vector<12x8xf32> -> vector<12x8xf32>
    %29 = vector.broadcast %25 : vector<12x1xf32> to vector<12x8xf32>
    %30 = arith.addf %29, %28 : vector<12x8xf32>
    %cst_23 = arith.constant 2.000000e-01 : f32
    %31 = vector.broadcast %cst_23 : f32 to vector<12x8xf32>
    %32 = arith.mulf %31, %30 : vector<12x8xf32>
    %33 = arith.maximumf %30, %32 : vector<12x8xf32>
    %cst_24 = arith.constant -1.000000e+30 : f32
    %34 = vector.broadcast %cst_24 : f32 to vector<12x8xf32>
    %35 = arith.select %17, %33, %34 : vector<12x8xi1>, vector<12x8xf32>
    %cst_25 = arith.constant dense<0xFF800000> : vector<12xf32>
    %36 = vector.multi_reduction <maximumf>, %35, %cst_25 [1] : vector<12x8xf32> to vector<12xf32>
    %37 = vector.shape_cast %36 : vector<12xf32> to vector<12x1xf32>
    %38 = vector.broadcast %37 : vector<12x1xf32> to vector<12x8xf32>
    %39 = arith.subf %35, %38 : vector<12x8xf32>
    %40 = math.exp %39 : vector<12x8xf32>
    %cst_26 = arith.constant 0.000000e+00 : f32
    %41 = vector.broadcast %cst_26 : f32 to vector<12x8xf32>
    %42 = arith.select %17, %40, %41 : vector<12x8xi1>, vector<12x8xf32>
    %cst_27 = arith.constant dense<0.000000e+00> : vector<12xf32>
    %43 = vector.multi_reduction <add>, %42, %cst_27 [1] : vector<12x8xf32> to vector<12xf32>
    %44 = vector.shape_cast %43 : vector<12xf32> to vector<12x1xf32>
    %cst_28 = arith.constant 0.000000e+00 : f32
    %45 = vector.broadcast %cst_28 : f32 to vector<12x1xf32>
    %46 = arith.cmpf ogt, %44, %45 : vector<12x1xf32>
    %47 = tpu.reciprocal %44 {approx = true} : vector<12x1xf32> -> vector<12x1xf32>
    %cst_29 = arith.constant 0.000000e+00 : f32
    %48 = vector.broadcast %cst_29 : f32 to vector<12x1xf32>
    %49 = arith.select %46, %47, %48 : vector<12x1xi1>, vector<12x1xf32>
    %cst_30 = arith.constant dense<0.000000e+00> : vector<12x16xf32>
    %50 = tpu.matmul %42, %18, %cst_30 {dimension_numbers = #tpu.dot_dimension_numbers<[1], [0], [0], [1], [0, 0, 1, 1], [], []>} : vector<12x8xf32>, vector<8x16xf32>, vector<12x16xf32> -> vector<12x16xf32>
    %51 = vector.broadcast %49 : vector<12x1xf32> to vector<12x16xf32>
    %52 = arith.mulf %50, %51 : vector<12x16xf32>
    %cst_31 = arith.constant 0.000000e+00 : f32
    %53 = vector.broadcast %cst_31 : f32 to vector<12x16xf32>
    %54 = arith.maximumf %52, %53 : vector<12x16xf32>
    %55 = vector.extract_strided_slice %13 {offsets = [0, 16], sizes = [8, 16], strides = [1, 1]} : vector<8x32xf32> to vector<8x16xf32>
    %56 = vector.extract_strided_slice %7 {offsets = [0, 16], sizes = [12, 16], strides = [1, 1]} : vector<12x32xf32> to vector<12x16xf32>
    %57 = vector.extract_strided_slice %14 {offsets = [1, 0], sizes = [1, 16], strides = [1, 1]} : vector<2x16xf32> to vector<1x16xf32>
    %58 = vector.extract_strided_slice %15 {offsets = [1, 0], sizes = [1, 16], strides = [1, 1]} : vector<2x16xf32> to vector<1x16xf32>
    %59 = vector.broadcast %58 : vector<1x16xf32> to vector<12x16xf32>
    %60 = arith.mulf %56, %59 : vector<12x16xf32>
    %cst_32 = arith.constant dense<0.000000e+00> : vector<12xf32>
    %61 = vector.multi_reduction <add>, %60, %cst_32 [1] : vector<12x16xf32> to vector<12xf32>
    %62 = vector.shape_cast %61 : vector<12xf32> to vector<12x1xf32>
    %63 = vector.shape_cast %57 : vector<1x16xf32> to vector<1x16xf32>
    %64 = vector.broadcast %63 : vector<1x16xf32> to vector<12x16xf32>
    %cst_33 = arith.constant dense<0.000000e+00> : vector<12x8xf32>
    %65 = tpu.matmul %64, %55, %cst_33 {dimension_numbers = #tpu.dot_dimension_numbers<[1], [1], [0], [0], [0, 0, 1, 0], [], []>} : vector<12x16xf32>, vector<8x16xf32>, vector<12x8xf32> -> vector<12x8xf32>
    %66 = vector.broadcast %62 : vector<12x1xf32> to vector<12x8xf32>
    %67 = arith.addf %66, %65 : vector<12x8xf32>
    %cst_34 = arith.constant 2.000000e-01 : f32
    %68 = vector.broadcast %cst_34 : f32 to vector<12x8xf32>
    %69 = arith.mulf %68, %67 : vector<12x8xf32>
    %70 = arith.maximumf %67, %69 : vector<12x8xf32>
    %cst_35 = arith.constant -1.000000e+30 : f32
    %71 = vector.broadcast %cst_35 : f32 to vector<12x8xf32>
    %72 = arith.select %17, %70, %71 : vector<12x8xi1>, vector<12x8xf32>
    %cst_36 = arith.constant dense<0xFF800000> : vector<12xf32>
    %73 = vector.multi_reduction <maximumf>, %72, %cst_36 [1] : vector<12x8xf32> to vector<12xf32>
    %74 = vector.shape_cast %73 : vector<12xf32> to vector<12x1xf32>
    %75 = vector.broadcast %74 : vector<12x1xf32> to vector<12x8xf32>
    %76 = arith.subf %72, %75 : vector<12x8xf32>
    %77 = math.exp %76 : vector<12x8xf32>
    %cst_37 = arith.constant 0.000000e+00 : f32
    %78 = vector.broadcast %cst_37 : f32 to vector<12x8xf32>
    %79 = arith.select %17, %77, %78 : vector<12x8xi1>, vector<12x8xf32>
    %cst_38 = arith.constant dense<0.000000e+00> : vector<12xf32>
    %80 = vector.multi_reduction <add>, %79, %cst_38 [1] : vector<12x8xf32> to vector<12xf32>
    %81 = vector.shape_cast %80 : vector<12xf32> to vector<12x1xf32>
    %cst_39 = arith.constant 0.000000e+00 : f32
    %82 = vector.broadcast %cst_39 : f32 to vector<12x1xf32>
    %83 = arith.cmpf ogt, %81, %82 : vector<12x1xf32>
    %84 = tpu.reciprocal %81 {approx = true} : vector<12x1xf32> -> vector<12x1xf32>
    %cst_40 = arith.constant 0.000000e+00 : f32
    %85 = vector.broadcast %cst_40 : f32 to vector<12x1xf32>
    %86 = arith.select %83, %84, %85 : vector<12x1xi1>, vector<12x1xf32>
    %cst_41 = arith.constant dense<0.000000e+00> : vector<12x16xf32>
    %87 = tpu.matmul %79, %55, %cst_41 {dimension_numbers = #tpu.dot_dimension_numbers<[1], [0], [0], [1], [0, 0, 1, 1], [], []>} : vector<12x8xf32>, vector<8x16xf32>, vector<12x16xf32> -> vector<12x16xf32>
    %88 = vector.broadcast %86 : vector<12x1xf32> to vector<12x16xf32>
    %89 = arith.mulf %87, %88 : vector<12x16xf32>
    %cst_42 = arith.constant 0.000000e+00 : f32
    %90 = vector.broadcast %cst_42 : f32 to vector<12x16xf32>
    %91 = arith.maximumf %89, %90 : vector<12x16xf32>
    %c0_43 = arith.constant 0 : index
    %c0_44 = arith.constant 0 : index
    %92 = vector.load %arg10[%c0_43, %c0_44] : memref<2x16xf32, #tpu.memory_space<vmem>>, vector<2x16xf32>
    %c0_45 = arith.constant 0 : index
    %c0_46 = arith.constant 0 : index
    %93 = vector.load %arg11[%c0_45, %c0_46] : memref<2x16xf32, #tpu.memory_space<vmem>>, vector<2x16xf32>
    %cst_47 = arith.constant 0.000000e+00 : f32
    %94 = vector.broadcast %cst_47 : f32 to vector<8x12xf32>
    %95 = arith.cmpf ogt, %1, %94 : vector<8x12xf32>
    %96 = vector.extract_strided_slice %7 {offsets = [0, 0], sizes = [12, 16], strides = [1, 1]} : vector<12x32xf32> to vector<12x16xf32>
    %97 = vector.extract_strided_slice %13 {offsets = [0, 0], sizes = [8, 16], strides = [1, 1]} : vector<8x32xf32> to vector<8x16xf32>
    %98 = vector.extract_strided_slice %92 {offsets = [0, 0], sizes = [1, 16], strides = [1, 1]} : vector<2x16xf32> to vector<1x16xf32>
    %99 = vector.extract_strided_slice %93 {offsets = [0, 0], sizes = [1, 16], strides = [1, 1]} : vector<2x16xf32> to vector<1x16xf32>
    %100 = vector.broadcast %99 : vector<1x16xf32> to vector<8x16xf32>
    %101 = arith.mulf %97, %100 : vector<8x16xf32>
    %cst_48 = arith.constant dense<0.000000e+00> : vector<8xf32>
    %102 = vector.multi_reduction <add>, %101, %cst_48 [1] : vector<8x16xf32> to vector<8xf32>
    %103 = vector.shape_cast %102 : vector<8xf32> to vector<8x1xf32>
    %104 = vector.shape_cast %98 : vector<1x16xf32> to vector<1x16xf32>
    %105 = vector.broadcast %104 : vector<1x16xf32> to vector<8x16xf32>
    %cst_49 = arith.constant dense<0.000000e+00> : vector<8x12xf32>
    %106 = tpu.matmul %105, %96, %cst_49 {dimension_numbers = #tpu.dot_dimension_numbers<[1], [1], [0], [0], [0, 0, 1, 0], [], []>} : vector<8x16xf32>, vector<12x16xf32>, vector<8x12xf32> -> vector<8x12xf32>
    %107 = vector.broadcast %103 : vector<8x1xf32> to vector<8x12xf32>
    %108 = arith.addf %107, %106 : vector<8x12xf32>
    %cst_50 = arith.constant 2.000000e-01 : f32
    %109 = vector.broadcast %cst_50 : f32 to vector<8x12xf32>
    %110 = arith.mulf %109, %108 : vector<8x12xf32>
    %111 = arith.maximumf %108, %110 : vector<8x12xf32>
    %cst_51 = arith.constant -1.000000e+30 : f32
    %112 = vector.broadcast %cst_51 : f32 to vector<8x12xf32>
    %113 = arith.select %95, %111, %112 : vector<8x12xi1>, vector<8x12xf32>
    %cst_52 = arith.constant dense<0xFF800000> : vector<8xf32>
    %114 = vector.multi_reduction <maximumf>, %113, %cst_52 [1] : vector<8x12xf32> to vector<8xf32>
    %115 = vector.shape_cast %114 : vector<8xf32> to vector<8x1xf32>
    %116 = vector.broadcast %115 : vector<8x1xf32> to vector<8x12xf32>
    %117 = arith.subf %113, %116 : vector<8x12xf32>
    %118 = math.exp %117 : vector<8x12xf32>
    %cst_53 = arith.constant 0.000000e+00 : f32
    %119 = vector.broadcast %cst_53 : f32 to vector<8x12xf32>
    %120 = arith.select %95, %118, %119 : vector<8x12xi1>, vector<8x12xf32>
    %cst_54 = arith.constant dense<0.000000e+00> : vector<8xf32>
    %121 = vector.multi_reduction <add>, %120, %cst_54 [1] : vector<8x12xf32> to vector<8xf32>
    %122 = vector.shape_cast %121 : vector<8xf32> to vector<8x1xf32>
    %cst_55 = arith.constant 0.000000e+00 : f32
    %123 = vector.broadcast %cst_55 : f32 to vector<8x1xf32>
    %124 = arith.cmpf ogt, %122, %123 : vector<8x1xf32>
    %125 = tpu.reciprocal %122 {approx = true} : vector<8x1xf32> -> vector<8x1xf32>
    %cst_56 = arith.constant 0.000000e+00 : f32
    %126 = vector.broadcast %cst_56 : f32 to vector<8x1xf32>
    %127 = arith.select %124, %125, %126 : vector<8x1xi1>, vector<8x1xf32>
    %cst_57 = arith.constant dense<0.000000e+00> : vector<8x16xf32>
    %128 = tpu.matmul %120, %96, %cst_57 {dimension_numbers = #tpu.dot_dimension_numbers<[1], [0], [0], [1], [0, 0, 1, 1], [], []>} : vector<8x12xf32>, vector<12x16xf32>, vector<8x16xf32> -> vector<8x16xf32>
    %129 = vector.broadcast %127 : vector<8x1xf32> to vector<8x16xf32>
    %130 = arith.mulf %128, %129 : vector<8x16xf32>
    %cst_58 = arith.constant 0.000000e+00 : f32
    %131 = vector.broadcast %cst_58 : f32 to vector<8x16xf32>
    %132 = arith.maximumf %130, %131 : vector<8x16xf32>
    %133 = vector.extract_strided_slice %7 {offsets = [0, 16], sizes = [12, 16], strides = [1, 1]} : vector<12x32xf32> to vector<12x16xf32>
    %134 = vector.extract_strided_slice %13 {offsets = [0, 16], sizes = [8, 16], strides = [1, 1]} : vector<8x32xf32> to vector<8x16xf32>
    %135 = vector.extract_strided_slice %92 {offsets = [1, 0], sizes = [1, 16], strides = [1, 1]} : vector<2x16xf32> to vector<1x16xf32>
    %136 = vector.extract_strided_slice %93 {offsets = [1, 0], sizes = [1, 16], strides = [1, 1]} : vector<2x16xf32> to vector<1x16xf32>
    %137 = vector.broadcast %136 : vector<1x16xf32> to vector<8x16xf32>
    %138 = arith.mulf %134, %137 : vector<8x16xf32>
    %cst_59 = arith.constant dense<0.000000e+00> : vector<8xf32>
    %139 = vector.multi_reduction <add>, %138, %cst_59 [1] : vector<8x16xf32> to vector<8xf32>
    %140 = vector.shape_cast %139 : vector<8xf32> to vector<8x1xf32>
    %141 = vector.shape_cast %135 : vector<1x16xf32> to vector<1x16xf32>
    %142 = vector.broadcast %141 : vector<1x16xf32> to vector<8x16xf32>
    %cst_60 = arith.constant dense<0.000000e+00> : vector<8x12xf32>
    %143 = tpu.matmul %142, %133, %cst_60 {dimension_numbers = #tpu.dot_dimension_numbers<[1], [1], [0], [0], [0, 0, 1, 0], [], []>} : vector<8x16xf32>, vector<12x16xf32>, vector<8x12xf32> -> vector<8x12xf32>
    %144 = vector.broadcast %140 : vector<8x1xf32> to vector<8x12xf32>
    %145 = arith.addf %144, %143 : vector<8x12xf32>
    %cst_61 = arith.constant 2.000000e-01 : f32
    %146 = vector.broadcast %cst_61 : f32 to vector<8x12xf32>
    %147 = arith.mulf %146, %145 : vector<8x12xf32>
    %148 = arith.maximumf %145, %147 : vector<8x12xf32>
    %cst_62 = arith.constant -1.000000e+30 : f32
    %149 = vector.broadcast %cst_62 : f32 to vector<8x12xf32>
    %150 = arith.select %95, %148, %149 : vector<8x12xi1>, vector<8x12xf32>
    %cst_63 = arith.constant dense<0xFF800000> : vector<8xf32>
    %151 = vector.multi_reduction <maximumf>, %150, %cst_63 [1] : vector<8x12xf32> to vector<8xf32>
    %152 = vector.shape_cast %151 : vector<8xf32> to vector<8x1xf32>
    %153 = vector.broadcast %152 : vector<8x1xf32> to vector<8x12xf32>
    %154 = arith.subf %150, %153 : vector<8x12xf32>
    %155 = math.exp %154 : vector<8x12xf32>
    %cst_64 = arith.constant 0.000000e+00 : f32
    %156 = vector.broadcast %cst_64 : f32 to vector<8x12xf32>
    %157 = arith.select %95, %155, %156 : vector<8x12xi1>, vector<8x12xf32>
    %cst_65 = arith.constant dense<0.000000e+00> : vector<8xf32>
    %158 = vector.multi_reduction <add>, %157, %cst_65 [1] : vector<8x12xf32> to vector<8xf32>
    %159 = vector.shape_cast %158 : vector<8xf32> to vector<8x1xf32>
    %cst_66 = arith.constant 0.000000e+00 : f32
    %160 = vector.broadcast %cst_66 : f32 to vector<8x1xf32>
    %161 = arith.cmpf ogt, %159, %160 : vector<8x1xf32>
    %162 = tpu.reciprocal %159 {approx = true} : vector<8x1xf32> -> vector<8x1xf32>
    %cst_67 = arith.constant 0.000000e+00 : f32
    %163 = vector.broadcast %cst_67 : f32 to vector<8x1xf32>
    %164 = arith.select %161, %162, %163 : vector<8x1xi1>, vector<8x1xf32>
    %cst_68 = arith.constant dense<0.000000e+00> : vector<8x16xf32>
    %165 = tpu.matmul %157, %133, %cst_68 {dimension_numbers = #tpu.dot_dimension_numbers<[1], [0], [0], [1], [0, 0, 1, 1], [], []>} : vector<8x12xf32>, vector<12x16xf32>, vector<8x16xf32> -> vector<8x16xf32>
    %166 = vector.broadcast %164 : vector<8x1xf32> to vector<8x16xf32>
    %167 = arith.mulf %165, %166 : vector<8x16xf32>
    %cst_69 = arith.constant 0.000000e+00 : f32
    %168 = vector.broadcast %cst_69 : f32 to vector<8x16xf32>
    %169 = arith.maximumf %167, %168 : vector<8x16xf32>
    %c0_70 = arith.constant 0 : index
    %c0_71 = arith.constant 0 : index
    %170 = vector.load %arg12[%c0_70, %c0_71] : memref<32x16xf32, #tpu.memory_space<vmem>>, vector<32x16xf32>
    %c0_72 = arith.constant 0 : index
    %c0_73 = arith.constant 0 : index
    %171 = vector.load %arg14[%c0_72, %c0_73] : memref<32x16xf32, #tpu.memory_space<vmem>>, vector<32x16xf32>
    %c0_74 = arith.constant 0 : index
    %c0_75 = arith.constant 0 : index
    %172 = vector.load %arg13[%c0_74, %c0_75] : memref<1x16xf32, #tpu.memory_space<vmem>>, vector<1x16xf32>
    %c0_76 = arith.constant 0 : index
    %c0_77 = arith.constant 0 : index
    %173 = vector.load %arg15[%c0_76, %c0_77] : memref<1x16xf32, #tpu.memory_space<vmem>>, vector<1x16xf32>
    %cst_78 = arith.constant 0.000000e+00 : f32
    %174 = vector.broadcast %cst_78 : f32 to vector<12x16xf32>
    %175 = arith.cmpf ogt, %54, %174 : vector<12x16xf32>
    %176 = math.exp %54 : vector<12x16xf32>
    %cst_79 = arith.constant 1.000000e+00 : f32
    %177 = vector.broadcast %cst_79 : f32 to vector<12x16xf32>
    %178 = arith.subf %176, %177 : vector<12x16xf32>
    %179 = arith.select %175, %54, %178 : vector<12x16xi1>, vector<12x16xf32>
    %180 = vector.extract_strided_slice %170 {offsets = [0, 0], sizes = [16, 16], strides = [1, 1]} : vector<32x16xf32> to vector<16x16xf32>
    %cst_80 = arith.constant dense<0.000000e+00> : vector<12x16xf32>
    %181 = tpu.matmul %179, %180, %cst_80 {dimension_numbers = #tpu.dot_dimension_numbers<[1], [0], [0], [1], [0, 0, 1, 1], [], []>} : vector<12x16xf32>, vector<16x16xf32>, vector<12x16xf32> -> vector<12x16xf32>
    %182 = vector.broadcast %172 : vector<1x16xf32> to vector<12x16xf32>
    %183 = arith.addf %182, %181 : vector<12x16xf32>
    %cst_81 = arith.constant 0.000000e+00 : f32
    %184 = vector.broadcast %cst_81 : f32 to vector<8x16xf32>
    %185 = arith.cmpf ogt, %132, %184 : vector<8x16xf32>
    %186 = math.exp %132 : vector<8x16xf32>
    %cst_82 = arith.constant 1.000000e+00 : f32
    %187 = vector.broadcast %cst_82 : f32 to vector<8x16xf32>
    %188 = arith.subf %186, %187 : vector<8x16xf32>
    %189 = arith.select %185, %132, %188 : vector<8x16xi1>, vector<8x16xf32>
    %190 = vector.extract_strided_slice %171 {offsets = [0, 0], sizes = [16, 16], strides = [1, 1]} : vector<32x16xf32> to vector<16x16xf32>
    %cst_83 = arith.constant dense<0.000000e+00> : vector<8x16xf32>
    %191 = tpu.matmul %189, %190, %cst_83 {dimension_numbers = #tpu.dot_dimension_numbers<[1], [0], [0], [1], [0, 0, 1, 1], [], []>} : vector<8x16xf32>, vector<16x16xf32>, vector<8x16xf32> -> vector<8x16xf32>
    %192 = vector.broadcast %173 : vector<1x16xf32> to vector<8x16xf32>
    %193 = arith.addf %192, %191 : vector<8x16xf32>
    %cst_84 = arith.constant 0.000000e+00 : f32
    %194 = vector.broadcast %cst_84 : f32 to vector<12x16xf32>
    %195 = arith.cmpf ogt, %91, %194 : vector<12x16xf32>
    %196 = math.exp %91 : vector<12x16xf32>
    %cst_85 = arith.constant 1.000000e+00 : f32
    %197 = vector.broadcast %cst_85 : f32 to vector<12x16xf32>
    %198 = arith.subf %196, %197 : vector<12x16xf32>
    %199 = arith.select %195, %91, %198 : vector<12x16xi1>, vector<12x16xf32>
    %200 = vector.extract_strided_slice %170 {offsets = [16, 0], sizes = [16, 16], strides = [1, 1]} : vector<32x16xf32> to vector<16x16xf32>
    %cst_86 = arith.constant dense<0.000000e+00> : vector<12x16xf32>
    %201 = tpu.matmul %199, %200, %cst_86 {dimension_numbers = #tpu.dot_dimension_numbers<[1], [0], [0], [1], [0, 0, 1, 1], [], []>} : vector<12x16xf32>, vector<16x16xf32>, vector<12x16xf32> -> vector<12x16xf32>
    %202 = arith.addf %183, %201 : vector<12x16xf32>
    %cst_87 = arith.constant 0.000000e+00 : f32
    %203 = vector.broadcast %cst_87 : f32 to vector<8x16xf32>
    %204 = arith.cmpf ogt, %169, %203 : vector<8x16xf32>
    %205 = math.exp %169 : vector<8x16xf32>
    %cst_88 = arith.constant 1.000000e+00 : f32
    %206 = vector.broadcast %cst_88 : f32 to vector<8x16xf32>
    %207 = arith.subf %205, %206 : vector<8x16xf32>
    %208 = arith.select %204, %169, %207 : vector<8x16xi1>, vector<8x16xf32>
    %209 = vector.extract_strided_slice %171 {offsets = [16, 0], sizes = [16, 16], strides = [1, 1]} : vector<32x16xf32> to vector<16x16xf32>
    %cst_89 = arith.constant dense<0.000000e+00> : vector<8x16xf32>
    %210 = tpu.matmul %208, %209, %cst_89 {dimension_numbers = #tpu.dot_dimension_numbers<[1], [0], [0], [1], [0, 0, 1, 1], [], []>} : vector<8x16xf32>, vector<16x16xf32>, vector<8x16xf32> -> vector<8x16xf32>
    %211 = arith.addf %193, %210 : vector<8x16xf32>
    %c0_90 = arith.constant 0 : index
    %c0_91 = arith.constant 0 : index
    %212 = vector.load %arg16[%c0_90, %c0_91] : memref<1x16xf32, #tpu.memory_space<vmem>>, vector<1x16xf32>
    %c0_92 = arith.constant 0 : index
    %c0_93 = arith.constant 0 : index
    %213 = vector.load %arg17[%c0_92, %c0_93] : memref<1x16xf32, #tpu.memory_space<vmem>>, vector<1x16xf32>
    %cst_94 = arith.constant 0.000000e+00 : f32
    %214 = vector.broadcast %cst_94 : f32 to vector<12x8xf32>
    %215 = arith.cmpf ogt, %0, %214 : vector<12x8xf32>
    %216 = vector.broadcast %213 : vector<1x16xf32> to vector<12x16xf32>
    %217 = arith.mulf %202, %216 : vector<12x16xf32>
    %cst_95 = arith.constant dense<0.000000e+00> : vector<12xf32>
    %218 = vector.multi_reduction <add>, %217, %cst_95 [1] : vector<12x16xf32> to vector<12xf32>
    %219 = vector.shape_cast %218 : vector<12xf32> to vector<12x1xf32>
    %220 = vector.shape_cast %212 : vector<1x16xf32> to vector<1x16xf32>
    %221 = vector.broadcast %220 : vector<1x16xf32> to vector<12x16xf32>
    %cst_96 = arith.constant dense<0.000000e+00> : vector<12x8xf32>
    %222 = tpu.matmul %221, %211, %cst_96 {dimension_numbers = #tpu.dot_dimension_numbers<[1], [1], [0], [0], [0, 0, 1, 0], [], []>} : vector<12x16xf32>, vector<8x16xf32>, vector<12x8xf32> -> vector<12x8xf32>
    %223 = vector.broadcast %219 : vector<12x1xf32> to vector<12x8xf32>
    %224 = arith.addf %223, %222 : vector<12x8xf32>
    %cst_97 = arith.constant 2.000000e-01 : f32
    %225 = vector.broadcast %cst_97 : f32 to vector<12x8xf32>
    %226 = arith.mulf %225, %224 : vector<12x8xf32>
    %227 = arith.maximumf %224, %226 : vector<12x8xf32>
    %cst_98 = arith.constant -1.000000e+30 : f32
    %228 = vector.broadcast %cst_98 : f32 to vector<12x8xf32>
    %229 = arith.select %215, %227, %228 : vector<12x8xi1>, vector<12x8xf32>
    %cst_99 = arith.constant dense<0xFF800000> : vector<12xf32>
    %230 = vector.multi_reduction <maximumf>, %229, %cst_99 [1] : vector<12x8xf32> to vector<12xf32>
    %231 = vector.shape_cast %230 : vector<12xf32> to vector<12x1xf32>
    %232 = vector.broadcast %231 : vector<12x1xf32> to vector<12x8xf32>
    %233 = arith.subf %229, %232 : vector<12x8xf32>
    %234 = math.exp %233 : vector<12x8xf32>
    %cst_100 = arith.constant 0.000000e+00 : f32
    %235 = vector.broadcast %cst_100 : f32 to vector<12x8xf32>
    %236 = arith.select %215, %234, %235 : vector<12x8xi1>, vector<12x8xf32>
    %cst_101 = arith.constant dense<0.000000e+00> : vector<12xf32>
    %237 = vector.multi_reduction <add>, %236, %cst_101 [1] : vector<12x8xf32> to vector<12xf32>
    %238 = vector.shape_cast %237 : vector<12xf32> to vector<12x1xf32>
    %cst_102 = arith.constant 0.000000e+00 : f32
    %239 = vector.broadcast %cst_102 : f32 to vector<12x1xf32>
    %240 = arith.cmpf ogt, %238, %239 : vector<12x1xf32>
    %241 = tpu.reciprocal %238 {approx = true} : vector<12x1xf32> -> vector<12x1xf32>
    %cst_103 = arith.constant 0.000000e+00 : f32
    %242 = vector.broadcast %cst_103 : f32 to vector<12x1xf32>
    %243 = arith.select %240, %241, %242 : vector<12x1xi1>, vector<12x1xf32>
    %cst_104 = arith.constant dense<0.000000e+00> : vector<12x16xf32>
    %244 = tpu.matmul %236, %211, %cst_104 {dimension_numbers = #tpu.dot_dimension_numbers<[1], [0], [0], [1], [0, 0, 1, 1], [], []>} : vector<12x8xf32>, vector<8x16xf32>, vector<12x16xf32> -> vector<12x16xf32>
    %245 = vector.broadcast %243 : vector<12x1xf32> to vector<12x16xf32>
    %246 = arith.mulf %244, %245 : vector<12x16xf32>
    %cst_105 = arith.constant 0.000000e+00 : f32
    %247 = vector.broadcast %cst_105 : f32 to vector<12x16xf32>
    %248 = arith.maximumf %246, %247 : vector<12x16xf32>
    %c0_106 = arith.constant 0 : index
    %c0_107 = arith.constant 0 : index
    %249 = vector.load %arg18[%c0_106, %c0_107] : memref<16x5xf32, #tpu.memory_space<vmem>>, vector<16x5xf32>
    %c0_108 = arith.constant 0 : index
    %c0_109 = arith.constant 0 : index
    %250 = vector.load %arg19[%c0_108, %c0_109] : memref<1x5xf32, #tpu.memory_space<vmem>>, vector<1x5xf32>
    %cst_110 = arith.constant dense<0.000000e+00> : vector<12x5xf32>
    %251 = tpu.matmul %248, %249, %cst_110 {dimension_numbers = #tpu.dot_dimension_numbers<[1], [0], [0], [1], [0, 0, 1, 1], [], []>} : vector<12x16xf32>, vector<16x5xf32>, vector<12x5xf32> -> vector<12x5xf32>
    %252 = vector.broadcast %250 : vector<1x5xf32> to vector<12x5xf32>
    %253 = arith.addf %252, %251 : vector<12x5xf32>
    %c0_111 = arith.constant 0 : index
    %c0_112 = arith.constant 0 : index
    %254 = vector.load %arg20[%c0_111, %c0_112] : memref<12x5xf32, #tpu.memory_space<vmem>>, vector<12x5xf32>
    tpu.vector_store %arg20[%c0_111, %c0_112], %253 {strides = array<i32>} : memref<12x5xf32, #tpu.memory_space<vmem>>, vector<12x5xf32>,
    return
  }
}

</mosaic_0001>

<llo_original>
// kernel: han_forward.1
$region0: #{han_forward.1}
  #allocation0 [shape = 'u32[]', space=smem, size = 0x4, offset = 0x4, fixed_abs, tag = 'smem constant byte address 0x4 - core index']
  #allocation1 [shape = 'u32[144,128]{1,0:T(1,128)}', space=vmem, size = 0x12000, scoped, tag = 'internal scratch']
  %s0 = inlined_call_operand.vmem [shape: f32[12,16], index: 0, kind: input, shape index: {}]
  %s1 = inlined_call_operand.vmem [shape: f32[8,16], index: 1, kind: input, shape index: {}]
  %s2 = inlined_call_operand.vmem [shape: f32[12,8], index: 2, kind: input, shape index: {}]
  %s3 = inlined_call_operand.vmem [shape: f32[8,12], index: 3, kind: input, shape index: {}]
  %s4 = inlined_call_operand.vmem [shape: f32[16,32], index: 4, kind: input, shape index: {}]
  %s5 = inlined_call_operand.vmem [shape: f32[1,32], index: 5, kind: input, shape index: {}]
  %s6 = inlined_call_operand.vmem [shape: f32[16,32], index: 6, kind: input, shape index: {}]
  %s7 = inlined_call_operand.vmem [shape: f32[1,32], index: 7, kind: input, shape index: {}]
  %s8 = inlined_call_operand.vmem [shape: f32[2,16], index: 8, kind: input, shape index: {}]
  %s9 = inlined_call_operand.vmem [shape: f32[2,16], index: 9, kind: input, shape index: {}]
  %s10 = inlined_call_operand.vmem [shape: f32[2,16], index: 10, kind: input, shape index: {}]
  %s11 = inlined_call_operand.vmem [shape: f32[2,16], index: 11, kind: input, shape index: {}]
  %s12 = inlined_call_operand.vmem [shape: f32[32,16], index: 12, kind: input, shape index: {}]
  %s13 = inlined_call_operand.vmem [shape: f32[1,16], index: 13, kind: input, shape index: {}]
  %s14 = inlined_call_operand.vmem [shape: f32[32,16], index: 14, kind: input, shape index: {}]
  %s15 = inlined_call_operand.vmem [shape: f32[1,16], index: 15, kind: input, shape index: {}]
  %s16 = inlined_call_operand.vmem [shape: f32[1,16], index: 16, kind: input, shape index: {}]
  %s17 = inlined_call_operand.vmem [shape: f32[1,16], index: 17, kind: input, shape index: {}]
  %s18 = inlined_call_operand.vmem [shape: f32[16,5], index: 18, kind: input, shape index: {}]
  %s19 = inlined_call_operand.vmem [shape: f32[1,5], index: 19, kind: input, shape index: {}]
  %s20 = inlined_call_operand.vmem [shape: f32[12,5], index: 20, kind: output, shape index: {}]
  %s21 = sld [smem:[#allocation0]]
  $region90: #{han_forward.1} parent=0
    _
  %s23 = ssub.s32 1, %s21
  %s24 = scalar_select 0, %s23, %s21
  // Predicated region
  $region2: #{han_forward.1} parent=0 // pred_check
    _
  $region3: #{han_forward.1} parent=0 // pred_check_branch
    %26 = sbr.rel (0) target = $region5
  $region4: #{han_forward.1} parent=0 // pred_region
    _
  $region5: #{han_forward.1} parent=0 // pred_fallthru
    _
  // Predicated region
  $region6: #{han_forward.1} parent=0 // pred_check
    _
  $region7: #{han_forward.1} parent=0 // pred_check_branch
    %28 = sbr.rel (0) target = $region9
  $region8: #{han_forward.1} parent=0 // pred_region
    _
  $region9: #{han_forward.1} parent=0 // pred_fallthru
    _
  // Predicated region
  $region10: #{han_forward.1} parent=0 // pred_check
    _
  $region11: #{han_forward.1} parent=0 // pred_check_branch
    %30 = sbr.rel (0) target = $region13
  $region12: #{han_forward.1} parent=0 // pred_region
    _
  $region13: #{han_forward.1} parent=0 // pred_fallthru
    _
  // Predicated region
  $region14: #{han_forward.1} parent=0 // pred_check
    _
  $region15: #{han_forward.1} parent=0 // pred_check_branch
    %32 = sbr.rel (0) target = $region17
  $region16: #{han_forward.1} parent=0 // pred_region
    _
  $region17: #{han_forward.1} parent=0 // pred_fallthru
    _
  // Predicated region
  $region18: #{han_forward.1} parent=0 // pred_check
    _
  $region19: #{han_forward.1} parent=0 // pred_check_branch
    %34 = sbr.rel (0) target = $region21
  $region20: #{han_forward.1} parent=0 // pred_region
    _
  $region21: #{han_forward.1} parent=0 // pred_fallthru
    _
  // Predicated region
  $region22: #{han_forward.1} parent=0 // pred_check
    _
  $region23: #{han_forward.1} parent=0 // pred_check_branch
    %36 = sbr.rel (0) target = $region25
  $region24: #{han_forward.1} parent=0 // pred_region
    _
  $region25: #{han_forward.1} parent=0 // pred_fallthru
    _
  // Predicated region
  $region26: #{han_forward.1} parent=0 // pred_check
    _
  $region27: #{han_forward.1} parent=0 // pred_check_branch
    %38 = sbr.rel (0) target = $region29
  $region28: #{han_forward.1} parent=0 // pred_region
    _
  $region29: #{han_forward.1} parent=0 // pred_fallthru
    _
  // Predicated region
  $region30: #{han_forward.1} parent=0 // pred_check
    _
  $region31: #{han_forward.1} parent=0 // pred_check_branch
    %40 = sbr.rel (0) target = $region33
  $region32: #{han_forward.1} parent=0 // pred_region
    _
  $region33: #{han_forward.1} parent=0 // pred_fallthru
    _
  // Predicated region
  $region34: #{han_forward.1} parent=0 // pred_check
    _
  $region35: #{han_forward.1} parent=0 // pred_check_branch
    %42 = sbr.rel (0) target = $region37
  $region36: #{han_forward.1} parent=0 // pred_region
    _
  $region37: #{han_forward.1} parent=0 // pred_fallthru
    _
  // Predicated region
  $region38: #{han_forward.1} parent=0 // pred_check
    _
  $region39: #{han_forward.1} parent=0 // pred_check_branch
    %44 = sbr.rel (0) target = $region41
  $region40: #{han_forward.1} parent=0 // pred_region
    _
  $region41: #{han_forward.1} parent=0 // pred_fallthru
    _
  // Predicated region
  $region42: #{han_forward.1} parent=0 // pred_check
    _
  $region43: #{han_forward.1} parent=0 // pred_check_branch
    %46 = sbr.rel (0) target = $region45
  $region44: #{han_forward.1} parent=0 // pred_region
    _
  $region45: #{han_forward.1} parent=0 // pred_fallthru
    _
  // Predicated region
  $region46: #{han_forward.1} parent=0 // pred_check
    _
  $region47: #{han_forward.1} parent=0 // pred_check_branch
    %48 = sbr.rel (0) target = $region49
  $region48: #{han_forward.1} parent=0 // pred_region
    _
  $region49: #{han_forward.1} parent=0 // pred_fallthru
    _
  // Predicated region
  $region50: #{han_forward.1} parent=0 // pred_check
    _
  $region51: #{han_forward.1} parent=0 // pred_check_branch
    %50 = sbr.rel (0) target = $region53
  $region52: #{han_forward.1} parent=0 // pred_region
    _
  $region53: #{han_forward.1} parent=0 // pred_fallthru
    _
  // Predicated region
  $region54: #{han_forward.1} parent=0 // pred_check
    _
  $region55: #{han_forward.1} parent=0 // pred_check_branch
    %52 = sbr.rel (0) target = $region57
  $region56: #{han_forward.1} parent=0 // pred_region
    _
  $region57: #{han_forward.1} parent=0 // pred_fallthru
    _
  // Predicated region
  $region58: #{han_forward.1} parent=0 // pred_check
    _
  $region59: #{han_forward.1} parent=0 // pred_check_branch
    %54 = sbr.rel (0) target = $region61
  $region60: #{han_forward.1} parent=0 // pred_region
    _
  $region61: #{han_forward.1} parent=0 // pred_fallthru
    _
  // Predicated region
  $region62: #{han_forward.1} parent=0 // pred_check
    _
  $region63: #{han_forward.1} parent=0 // pred_check_branch
    %56 = sbr.rel (0) target = $region65
  $region64: #{han_forward.1} parent=0 // pred_region
    _
  $region65: #{han_forward.1} parent=0 // pred_fallthru
    _
  // Predicated region
  $region66: #{han_forward.1} parent=0 // pred_check
    _
  $region67: #{han_forward.1} parent=0 // pred_check_branch
    %58 = sbr.rel (0) target = $region69
  $region68: #{han_forward.1} parent=0 // pred_region
    _
  $region69: #{han_forward.1} parent=0 // pred_fallthru
    _
  // Predicated region
  $region70: #{han_forward.1} parent=0 // pred_check
    _
  $region71: #{han_forward.1} parent=0 // pred_check_branch
    %60 = sbr.rel (0) target = $region73
  $region72: #{han_forward.1} parent=0 // pred_region
    _
  $region73: #{han_forward.1} parent=0 // pred_fallthru
    _
  // Predicated region
  $region74: #{han_forward.1} parent=0 // pred_check
    _
  $region75: #{han_forward.1} parent=0 // pred_check_branch
    %62 = sbr.rel (0) target = $region77
  $region76: #{han_forward.1} parent=0 // pred_region
    _
  $region77: #{han_forward.1} parent=0 // pred_fallthru
    _
  // Predicated region
  $region78: #{han_forward.1} parent=0 // pred_check
    _
  $region79: #{han_forward.1} parent=0 // pred_check_branch
    %64 = sbr.rel (0) target = $region81
  $region80: #{han_forward.1} parent=0 // pred_region
    _
  $region81: #{han_forward.1} parent=0 // pred_fallthru
    _
  %v65 = vld [vmem:[%s2] sm:$0xff]
  %v66 = vld [vmem:[%s2 + $0x8] sm:$0xf]
  %v67 = vld [vmem:[%s3] sm:$0xff]
  %v68 = vld [vmem:[%s0] sm:$0xff]
  %v69 = vld [vmem:[%s0 + $0x8] sm:$0xf]
  %v70 = vld [vmem:[%s4] sm:$0xff]
  %v71 = vld [vmem:[%s4 + $0x8] sm:$0xff]
  %v72 = vld [vmem:[%s5] sm:$0x1]
  %v74 = vlaneseq
  %v75 = vshrl.u32 %v74, 7
  %v76 = vsub.s32 0, %v75
  %v77 = vrot.slane %v72, %v76
  %vm79 = vcmask 130048
  %v81 = vsel %vm79, %v68, 0
  %v84 = vsel %vm79, %v69, 0
  %86 = vmatprep.subr.mxu0 0.0
  %87 = vmatpush1.msra.mxu0 %v70
  %88 = vmatprep.subr.mxu0 0.0
  %89 = vmatpush1.msra.mxu0 %v71
  %90 = vmatprep.subr.mxu0 0.0
  %91 = vmatpush1.msra.mxu0 0.0
  %92 = vmatprep.subr.mxu0 0.0
  %93 = vmatpush1.msra.mxu0 0.0
  %94 = vmatprep.subr.mxu0 0.0
  %95 = vmatpush1.msra.mxu0 0.0
  %96 = vmatprep.subr.mxu0 0.0
  %97 = vmatpush1.msra.mxu0 0.0
  %98 = vmatprep.subr.mxu0 0.0
  %99 = vmatpush1.msra.mxu0 0.0
  %100 = vmatprep.subr.mxu0 0.0
  %101 = vmatpush1.msra.mxu0 0.0
  %102 = vmatprep.subr.mxu0 0.0
  %103 = vmatpush1.msra.mxu0 0.0
  %104 = vmatprep.subr.mxu0 0.0
  %105 = vmatpush1.msra.mxu0 0.0
  %106 = vmatprep.subr.mxu0 0.0
  %107 = vmatpush1.msra.mxu0 0.0
  %108 = vmatprep.subr.mxu0 0.0
  %109 = vmatpush1.msra.mxu0 0.0
  %110 = vmatprep.subr.mxu0 0.0
  %111 = vmatpush1.msra.mxu0 0.0
  %112 = vmatprep.subr.mxu0 0.0
  %113 = vmatpush1.msra.mxu0 0.0
  %114 = vmatprep.subr.mxu0 0.0
  %115 = vmatpush1.msra.mxu0 0.0
  %116 = vmatprep.subr.mxu0 0.0
  %117 = vmatpush1.msra.mxu0 0.0
  %118 = vmatprep.subr.mxu0 0.0
  %119 = vmatpush1.msra.mxu0 0.0
  %120 = vmatprep.subr.mxu0 0.0
  %121 = vmatpush1.msra.mxu0 0.0
  %122 = vmatprep.subr.mxu0 0.0
  %123 = vmatpush1.msra.mxu0 0.0
  %124 = vmatprep.subr.mxu0 0.0
  %125 = vmatpush1.msra.mxu0 0.0
  %126 = vmatprep.subr.mxu0 0.0
  %127 = vmatpush1.msra.mxu0 0.0
  %128 = vmatprep.subr.mxu0 0.0
  %129 = vmatpush1.msra.mxu0 0.0
  %130 = vmatprep.subr.mxu0 0.0
  %131 = vmatpush1.msra.mxu0 0.0
  %132 = vmatprep.subr.mxu0 0.0
  %133 = vmatpush1.msra.mxu0 0.0
  %134 = vmatprep.subr.mxu0 0.0
  %135 = vmatpush1.msra.mxu0 0.0
  %136 = vmatprep.subr.mxu0 0.0
  %137 = vmatpush1.msra.mxu0 0.0
  %138 = vmatprep.subr.mxu0 0.0
  %139 = vmatpush1.msra.mxu0 0.0
  %140 = vmatprep.subr.mxu0 0.0
  %141 = vmatpush1.msra.mxu0 0.0
  %142 = vmatprep.subr.mxu0 0.0
  %143 = vmatpush1.msra.mxu0 0.0
  %144 = vmatprep.subr.mxu0 0.0
  %145 = vmatpush1.msra.mxu0 0.0
  %146 = vmatprep.subr.mxu0 0.0
  %147 = vmatpush1.msra.mxu0 0.0
  %148 = vmatprep.subr.mxu0 0.0
  %149 = vmatpush1.msra.mxu0 0.0
  %150 = vmatprep.mubr.f32.mxu0 0.0
  %151 = vmatmul.mubr.f32.gmra.mrb[0].mxu0 %v81
  %v152 = vpop.f32.mrb[0].mxu0
  %v153 = vadd.f32 %v77, %v152
  %v154 = vpop.f32.mrb[0].mxu0
  %155 = vmatprep.mubr.f32.mxu0 0.0
  %156 = vmatmul.mubr.f32.gmra.mrb[0].mxu0 %v84
  %v157 = vpop.f32.mrb[0].mxu0
  %v158 = vadd.f32 %v77, %v157
  %v159 = vpop.f32.mrb[0].mxu0
  %160 = vdwg.mxu0
  %v161 = vld [vmem:[%s1] sm:$0xff]
  %v162 = vld [vmem:[%s6] sm:$0xff]
  %v163 = vld [vmem:[%s6 + $0x8] sm:$0xff]
  %v164 = vld [vmem:[%s7] sm:$0x1]
  %v166 = vlaneseq
  %v167 = vshrl.u32 %v166, 7
  %v168 = vsub.s32 0, %v167
  %v169 = vrot.slane %v164, %v168
  %v172 = vsel %vm79, %v161, 0
  %174 = vmatprep.subr.mxu0 0.0
  %175 = vmatpush1.msra.mxu0 %v162
  %176 = vmatprep.subr.mxu0 0.0
  %177 = vmatpush1.msra.mxu0 %v163
  %178 = vmatprep.subr.mxu0 0.0
  %179 = vmatpush1.msra.mxu0 0.0
  %180 = vmatprep.subr.mxu0 0.0
  %181 = vmatpush1.msra.mxu0 0.0
  %182 = vmatprep.subr.mxu0 0.0
  %183 = vmatpush1.msra.mxu0 0.0
  %184 = vmatprep.subr.mxu0 0.0
  %185 = vmatpush1.msra.mxu0 0.0
  %186 = vmatprep.subr.mxu0 0.0
  %187 = vmatpush1.msra.mxu0 0.0
  %188 = vmatprep.subr.mxu0 0.0
  %189 = vmatpush1.msra.mxu0 0.0
  %190 = vmatprep.subr.mxu0 0.0
  %191 = vmatpush1.msra.mxu0 0.0
  %192 = vmatprep.subr.mxu0 0.0
  %193 = vmatpush1.msra.mxu0 0.0
  %194 = vmatprep.subr.mxu0 0.0
  %195 = vmatpush1.msra.mxu0 0.0
  %196 = vmatprep.subr.mxu0 0.0
  %197 = vmatpush1.msra.mxu0 0.0
  %198 = vmatprep.subr.mxu0 0.0
  %199 = vmatpush1.msra.mxu0 0.0
  %200 = vmatprep.subr.mxu0 0.0
  %201 = vmatpush1.msra.mxu0 0.0
  %202 = vmatprep.subr.mxu0 0.0
  %203 = vmatpush1.msra.mxu0 0.0
  %204 = vmatprep.subr.mxu0 0.0
  %205 = vmatpush1.msra.mxu0 0.0
  %206 = vmatprep.subr.mxu0 0.0
  %207 = vmatpush1.msra.mxu0 0.0
  %208 = vmatprep.subr.mxu0 0.0
  %209 = vmatpush1.msra.mxu0 0.0
  %210 = vmatprep.subr.mxu0 0.0
  %211 = vmatpush1.msra.mxu0 0.0
  %212 = vmatprep.subr.mxu0 0.0
  %213 = vmatpush1.msra.mxu0 0.0
  %214 = vmatprep.subr.mxu0 0.0
  %215 = vmatpush1.msra.mxu0 0.0
  %216 = vmatprep.subr.mxu0 0.0
  %217 = vmatpush1.msra.mxu0 0.0
  %218 = vmatprep.subr.mxu0 0.0
  %219 = vmatpush1.msra.mxu0 0.0
  %220 = vmatprep.subr.mxu0 0.0
  %221 = vmatpush1.msra.mxu0 0.0
  %222 = vmatprep.subr.mxu0 0.0
  %223 = vmatpush1.msra.mxu0 0.0
  %224 = vmatprep.subr.mxu0 0.0
  %225 = vmatpush1.msra.mxu0 0.0
  %226 = vmatprep.subr.mxu0 0.0
  %227 = vmatpush1.msra.mxu0 0.0
  %228 = vmatprep.subr.mxu0 0.0
  %229 = vmatpush1.msra.mxu0 0.0
  %230 = vmatprep.subr.mxu0 0.0
  %231 = vmatpush1.msra.mxu0 0.0
  %232 = vmatprep.subr.mxu0 0.0
  %233 = vmatpush1.msra.mxu0 0.0
  %234 = vmatprep.subr.mxu0 0.0
  %235 = vmatpush1.msra.mxu0 0.0
  %236 = vmatprep.subr.mxu0 0.0
  %237 = vmatpush1.msra.mxu0 0.0
  %238 = vmatprep.mubr.f32.mxu0 0.0
  %239 = vmatmul.mubr.f32.gmra.mrb[0].mxu0 %v172
  %v240 = vpop.f32.mrb[0].mxu0
  %v241 = vadd.f32 %v169, %v240
  %v242 = vpop.f32.mrb[0].mxu0
  %243 = vdwg.mxu0
  %v244 = vld [vmem:[%s8] sm:$0x3]
  %v245 = vld [vmem:[%s9] sm:$0x3]
  %vm246 = vcmp.gt.f32.partialorder %v65, 0.0
  %vm247 = vcmp.gt.f32.partialorder %v66, 0.0
  %v248 = vlaneseq
  %v249 = vshrl.u32 %v248, 7
  %v250 = vsub.s32 0, %v249
  %v251 = vrot.slane %v245, %v250
  %v252 = vmul.f32 %v153, %v251
  %v253 = vmul.f32 %v158, %v251
  %v254 = vsel %vm79, %v252, 0.0
  %255 = vadd.xlane.f32.xlu0 %v254
  %v256 = vpop.xlane.xlu0 %255
  %vm257 = vcmask 125952
  %v258 = vsel %vm257, %v253, 0.0
  %259 = vadd.xlane.f32.xlu0 %v258
  %v260 = vpop.xlane.xlu0 %259
  %v261 = vlaneseq
  %v262 = vshrl.u32 %v261, 7
  %v263 = vsub.s32 0, %v262
  %v264 = vrot.slane %v244, %v263
  %v266 = vsel %vm79, %v264, 0
  %v269 = vsel %vm79, %v241, 0
  %271 = vmatprep.subr.mxu0 0.0
  %272 = vmatpush1.xpose.msra.mxu0 %v269
  %273 = vmatprep.subr.mxu0 0.0
  %274 = vmatpush1.xpose.msra.mxu0 0.0
  %275 = vmatprep.subr.mxu0 0.0
  %276 = vmatpush1.xpose.msra.mxu0 0.0
  %277 = vmatprep.subr.mxu0 0.0
  %278 = vmatpush1.xpose.msra.mxu0 0.0
  %279 = vmatprep.subr.mxu0 0.0
  %280 = vmatpush1.xpose.msra.mxu0 0.0
  %281 = vmatprep.subr.mxu0 0.0
  %282 = vmatpush1.xpose.msra.mxu0 0.0
  %283 = vmatprep.subr.mxu0 0.0
  %284 = vmatpush1.xpose.msra.mxu0 0.0
  %285 = vmatprep.subr.mxu0 0.0
  %286 = vmatpush1.xpose.msra.mxu0 0.0
  %287 = vmatprep.subr.mxu0 0.0
  %288 = vmatpush1.xpose.msra.mxu0 0.0
  %289 = vmatprep.subr.mxu0 0.0
  %290 = vmatpush1.xpose.msra.mxu0 0.0
  %291 = vmatprep.subr.mxu0 0.0
  %292 = vmatpush1.xpose.msra.mxu0 0.0
  %293 = vmatprep.subr.mxu0 0.0
  %294 = vmatpush1.xpose.msra.mxu0 0.0
  %295 = vmatprep.subr.mxu0 0.0
  %296 = vmatpush1.xpose.msra.mxu0 0.0
  %297 = vmatprep.subr.mxu0 0.0
  %298 = vmatpush1.xpose.msra.mxu0 0.0
  %299 = vmatprep.subr.mxu0 0.0
  %300 = vmatpush1.xpose.msra.mxu0 0.0
  %301 = vmatprep.subr.mxu0 0.0
  %302 = vmatpush1.xpose.msra.mxu0 0.0
  %303 = vmatprep.subr.mxu0 0.0
  %304 = vmatpush1.xpose.msra.mxu0 0.0
  %305 = vmatprep.subr.mxu0 0.0
  %306 = vmatpush1.xpose.msra.mxu0 0.0
  %307 = vmatprep.subr.mxu0 0.0
  %308 = vmatpush1.xpose.msra.mxu0 0.0
  %309 = vmatprep.subr.mxu0 0.0
  %310 = vmatpush1.xpose.msra.mxu0 0.0
  %311 = vmatprep.subr.mxu0 0.0
  %312 = vmatpush1.xpose.msra.mxu0 0.0
  %313 = vmatprep.subr.mxu0 0.0
  %314 = vmatpush1.xpose.msra.mxu0 0.0
  %315 = vmatprep.subr.mxu0 0.0
  %316 = vmatpush1.xpose.msra.mxu0 0.0
  %317 = vmatprep.subr.mxu0 0.0
  %318 = vmatpush1.xpose.msra.mxu0 0.0
  %319 = vmatprep.subr.mxu0 0.0
  %320 = vmatpush1.xpose.msra.mxu0 0.0
  %321 = vmatprep.subr.mxu0 0.0
  %322 = vmatpush1.xpose.msra.mxu0 0.0
  %323 = vmatprep.subr.mxu0 0.0
  %324 = vmatpush1.xpose.msra.mxu0 0.0
  %325 = vmatprep.subr.mxu0 0.0
  %326 = vmatpush1.xpose.msra.mxu0 0.0
  %327 = vmatprep.subr.mxu0 0.0
  %328 = vmatpush1.xpose.msra.mxu0 0.0
  %329 = vmatprep.subr.mxu0 0.0
  %330 = vmatpush1.xpose.msra.mxu0 0.0
  %331 = vmatprep.subr.mxu0 0.0
  %332 = vmatpush1.xpose.msra.mxu0 0.0
  %333 = vmatprep.subr.mxu0 0.0
  %334 = vmatpush1.xpose.msra.mxu0 0.0
  %335 = vmatprep.mubr.f32.mxu0 0.0
  %336 = vmatmul.mubr.f32.gmra.mrb[0].mxu0 %v266
  %v337 = vpop.f32.mrb[0].mxu0
  %v338 = vadd.f32 0.0, %v337
  %v339 = vpop.f32.mrb[0].mxu0
  %340 = vmatprep.mubr.f32.mxu0 0.0
  %341 = vmatmul.mubr.f32.gmra.mrb[0].mxu0 %v266
  %v342 = vpop.f32.mrb[0].mxu0
  %v343 = vadd.f32 0.0, %v342
  %v344 = vpop.f32.mrb[0].mxu0
  %345 = vdwg.mxu0
  %v346 = vadd.f32 %v256, %v338
  %v347 = vadd.f32 %v260, %v343
  %v348 = vmul.f32 %v346, 0.2
  %v349 = vmul.f32 %v347, 0.2
  %v350 = vmax.f32 %v346, %v348
  %v351 = vmax.f32 %v347, %v349
  %v352 = vsel %vm246, %v350, -1e+30
  %v353 = vsel %vm247, %v351, -1e+30
  %vm354 = vcmask 64512
  %v355 = vsel %vm354, %v352, -inf
  %356 = vmax.xlane.f32.xlu0 %v355
  %v357 = vpop.xlane.xlu0 %356
  %vm358 = vcmask 60416
  %v359 = vsel %vm358, %v353, -inf
  %360 = vmax.xlane.f32.xlu0 %v359
  %v361 = vpop.xlane.xlu0 %360
  %v362 = vsub.f32 %v352, %v357
  %v363 = vsub.f32 %v353, %v361
  %v364 = vmul.f32 %v362, 1.442695
  %v365 = vpow.pop %v364
  %v366 = vmul.f32 %v363, 1.442695
  %v367 = vpow.pop %v366
  %v368 = vsel %vm246, %v365, 0.0
  %v369 = vsel %vm247, %v367, 0.0
  %v370 = vsel %vm354, %v368, 0.0
  %371 = vadd.xlane.f32.xlu0 %v370
  %v372 = vpop.xlane.xlu0 %371
  %v373 = vsel %vm358, %v369, 0.0
  %374 = vadd.xlane.f32.xlu0 %v373
  %v375 = vpop.xlane.xlu0 %374
  %vm376 = vcmp.gt.f32.partialorder %v372, 0.0
  %vm377 = vcmp.gt.f32.partialorder %v375, 0.0
  %v378 = vrcp.pop %v372
  %v379 = vrcp.pop %v375
  %v380 = vsel %vm376, %v378, 0.0
  %v381 = vsel %vm377, %v379, 0.0
  %v383 = vsel %vm354, %v368, 0
  %v386 = vsel %vm354, %v369, 0
  %388 = vmatprep.subr.mxu0 0.0
  %389 = vmatpush1.msra.mxu0 %v241
  %390 = vmatprep.subr.mxu0 0.0
  %391 = vmatpush1.msra.mxu0 0.0
  %392 = vmatprep.subr.mxu0 0.0
  %393 = vmatpush1.msra.mxu0 0.0
  %394 = vmatprep.subr.mxu0 0.0
  %395 = vmatpush1.msra.mxu0 0.0
  %396 = vmatprep.subr.mxu0 0.0
  %397 = vmatpush1.msra.mxu0 0.0
  %398 = vmatprep.subr.mxu0 0.0
  %399 = vmatpush1.msra.mxu0 0.0
  %400 = vmatprep.subr.mxu0 0.0
  %401 = vmatpush1.msra.mxu0 0.0
  %402 = vmatprep.subr.mxu0 0.0
  %403 = vmatpush1.msra.mxu0 0.0
  %404 = vmatprep.subr.mxu0 0.0
  %405 = vmatpush1.msra.mxu0 0.0
  %406 = vmatprep.subr.mxu0 0.0
  %407 = vmatpush1.msra.mxu0 0.0
  %408 = vmatprep.subr.mxu0 0.0
  %409 = vmatpush1.msra.mxu0 0.0
  %410 = vmatprep.subr.mxu0 0.0
  %411 = vmatpush1.msra.mxu0 0.0
  %412 = vmatprep.subr.mxu0 0.0
  %413 = vmatpush1.msra.mxu0 0.0
  %414 = vmatprep.subr.mxu0 0.0
  %415 = vmatpush1.msra.mxu0 0.0
  %416 = vmatprep.subr.mxu0 0.0
  %417 = vmatpush1.msra.mxu0 0.0
  %418 = vmatprep.subr.mxu0 0.0
  %419 = vmatpush1.msra.mxu0 0.0
  %420 = vmatprep.subr.mxu0 0.0
  %421 = vmatpush1.msra.mxu0 0.0
  %422 = vmatprep.subr.mxu0 0.0
  %423 = vmatpush1.msra.mxu0 0.0
  %424 = vmatprep.subr.mxu0 0.0
  %425 = vmatpush1.msra.mxu0 0.0
  %426 = vmatprep.subr.mxu0 0.0
  %427 = vmatpush1.msra.mxu0 0.0
  %428 = vmatprep.subr.mxu0 0.0
  %429 = vmatpush1.msra.mxu0 0.0
  %430 = vmatprep.subr.mxu0 0.0
  %431 = vmatpush1.msra.mxu0 0.0
  %432 = vmatprep.subr.mxu0 0.0
  %433 = vmatpush1.msra.mxu0 0.0
  %434 = vmatprep.subr.mxu0 0.0
  %435 = vmatpush1.msra.mxu0 0.0
  %436 = vmatprep.subr.mxu0 0.0
  %437 = vmatpush1.msra.mxu0 0.0
  %438 = vmatprep.subr.mxu0 0.0
  %439 = vmatpush1.msra.mxu0 0.0
  %440 = vmatprep.subr.mxu0 0.0
  %441 = vmatpush1.msra.mxu0 0.0
  %442 = vmatprep.subr.mxu0 0.0
  %443 = vmatpush1.msra.mxu0 0.0
  %444 = vmatprep.subr.mxu0 0.0
  %445 = vmatpush1.msra.mxu0 0.0
  %446 = vmatprep.subr.mxu0 0.0
  %447 = vmatpush1.msra.mxu0 0.0
  %448 = vmatprep.subr.mxu0 0.0
  %449 = vmatpush1.msra.mxu0 0.0
  %450 = vmatprep.subr.mxu0 0.0
  %451 = vmatpush1.msra.mxu0 0.0
  %452 = vmatprep.mubr.f32.mxu0 0.0
  %453 = vmatmul.mubr.f32.gmra.mrb[0].mxu0 %v383
  %v454 = vpop.f32.mrb[0].mxu0
  %v455 = vadd.f32 0.0, %v454
  %v456 = vpop.f32.mrb[0].mxu0
  %457 = vmatprep.mubr.f32.mxu0 0.0
  %458 = vmatmul.mubr.f32.gmra.mrb[0].mxu0 %v386
  %v459 = vpop.f32.mrb[0].mxu0
  %v460 = vadd.f32 0.0, %v459
  %v461 = vpop.f32.mrb[0].mxu0
  %462 = vdwg.mxu0
  %v463 = vmul.f32 %v455, %v380
  %v464 = vmul.f32 %v460, %v381
  %v465 = vmax.f32 %v463, 0.0
  %v466 = vmax.f32 %v464, 0.0
  %v467 = vlaneseq
  %v468 = vshrl.u32 %v467, 7
  %v469 = vsub.s32 1, %v468
  %v470 = vrot.slane %v245, %v469
  %472 = vrot.lane.b32.xlu0 %v470, 16
  %v473 = vpop.permute.xlu0 %472
  %v475 = vmul.f32 %v153, %v473
  %v476 = vmul.f32 %v158, %v473
  %479 = vrot.lane.b32.xlu0 %v475, 112
  %v480 = vpop.permute.xlu0 %479
  %481 = vrot.lane.b32.xlu0 %v476, 112
  %v482 = vpop.permute.xlu0 %481
  %v485 = vsel %vm79, %v480, 0.0
  %486 = vadd.xlane.f32.xlu0 %v485
  %v487 = vpop.xlane.xlu0 %486
  %v488 = vsel %vm257, %v482, 0.0
  %489 = vadd.xlane.f32.xlu0 %v488
  %v490 = vpop.xlane.xlu0 %489
  %v491 = vlaneseq
  %v492 = vshrl.u32 %v491, 7
  %v493 = vsub.s32 1, %v492
  %v494 = vrot.slane %v244, %v493
  %496 = vrot.lane.b32.xlu0 %v241, 112
  %v497 = vpop.permute.xlu0 %496
  %v498 = vsel %vm79, %v494, 0
  %v500 = vsel %vm79, %v497, 0
  %502 = vmatprep.subr.mxu0 0.0
  %503 = vmatpush1.xpose.msra.mxu0 %v500
  %504 = vmatprep.subr.mxu0 0.0
  %505 = vmatpush1.xpose.msra.mxu0 0.0
  %506 = vmatprep.subr.mxu0 0.0
  %507 = vmatpush1.xpose.msra.mxu0 0.0
  %508 = vmatprep.subr.mxu0 0.0
  %509 = vmatpush1.xpose.msra.mxu0 0.0
  %510 = vmatprep.subr.mxu0 0.0
  %511 = vmatpush1.xpose.msra.mxu0 0.0
  %512 = vmatprep.subr.mxu0 0.0
  %513 = vmatpush1.xpose.msra.mxu0 0.0
  %514 = vmatprep.subr.mxu0 0.0
  %515 = vmatpush1.xpose.msra.mxu0 0.0
  %516 = vmatprep.subr.mxu0 0.0
  %517 = vmatpush1.xpose.msra.mxu0 0.0
  %518 = vmatprep.subr.mxu0 0.0
  %519 = vmatpush1.xpose.msra.mxu0 0.0
  %520 = vmatprep.subr.mxu0 0.0
  %521 = vmatpush1.xpose.msra.mxu0 0.0
  %522 = vmatprep.subr.mxu0 0.0
  %523 = vmatpush1.xpose.msra.mxu0 0.0
  %524 = vmatprep.subr.mxu0 0.0
  %525 = vmatpush1.xpose.msra.mxu0 0.0
  %526 = vmatprep.subr.mxu0 0.0
  %527 = vmatpush1.xpose.msra.mxu0 0.0
  %528 = vmatprep.subr.mxu0 0.0
  %529 = vmatpush1.xpose.msra.mxu0 0.0
  %530 = vmatprep.subr.mxu0 0.0
  %531 = vmatpush1.xpose.msra.mxu0 0.0
  %532 = vmatprep.subr.mxu0 0.0
  %533 = vmatpush1.xpose.msra.mxu0 0.0
  %534 = vmatprep.subr.mxu0 0.0
  %535 = vmatpush1.xpose.msra.mxu0 0.0
  %536 = vmatprep.subr.mxu0 0.0
  %537 = vmatpush1.xpose.msra.mxu0 0.0
  %538 = vmatprep.subr.mxu0 0.0
  %539 = vmatpush1.xpose.msra.mxu0 0.0
  %540 = vmatprep.subr.mxu0 0.0
  %541 = vmatpush1.xpose.msra.mxu0 0.0
  %542 = vmatprep.subr.mxu0 0.0
  %543 = vmatpush1.xpose.msra.mxu0 0.0
  %544 = vmatprep.subr.mxu0 0.0
  %545 = vmatpush1.xpose.msra.mxu0 0.0
  %546 = vmatprep.subr.mxu0 0.0
  %547 = vmatpush1.xpose.msra.mxu0 0.0
  %548 = vmatprep.subr.mxu0 0.0
  %549 = vmatpush1.xpose.msra.mxu0 0.0
  %550 = vmatprep.subr.mxu0 0.0
  %551 = vmatpush1.xpose.msra.mxu0 0.0
  %552 = vmatprep.subr.mxu0 0.0
  %553 = vmatpush1.xpose.msra.mxu0 0.0
  %554 = vmatprep.subr.mxu0 0.0
  %555 = vmatpush1.xpose.msra.mxu0 0.0
  %556 = vmatprep.subr.mxu0 0.0
  %557 = vmatpush1.xpose.msra.mxu0 0.0
  %558 = vmatprep.subr.mxu0 0.0
  %559 = vmatpush1.xpose.msra.mxu0 0.0
  %560 = vmatprep.subr.mxu0 0.0
  %561 = vmatpush1.xpose.msra.mxu0 0.0
  %562 = vmatprep.subr.mxu0 0.0
  %563 = vmatpush1.xpose.msra.mxu0 0.0
  %564 = vmatprep.subr.mxu0 0.0
  %565 = vmatpush1.xpose.msra.mxu0 0.0
  %566 = vmatprep.mubr.f32.mxu0 0.0
  %567 = vmatmul.mubr.f32.gmra.mrb[0].mxu0 %v498
  %v568 = vpop.f32.mrb[0].mxu0
  %v569 = vadd.f32 0.0, %v568
  %v570 = vpop.f32.mrb[0].mxu0
  %571 = vmatprep.mubr.f32.mxu0 0.0
  %572 = vmatmul.mubr.f32.gmra.mrb[0].mxu0 %v498
  %v573 = vpop.f32.mrb[0].mxu0
  %v574 = vadd.f32 0.0, %v573
  %v575 = vpop.f32.mrb[0].mxu0
  %576 = vdwg.mxu0
  %v577 = vadd.f32 %v487, %v569
  %v578 = vadd.f32 %v490, %v574
  %v579 = vmul.f32 %v577, 0.2
  %v580 = vmul.f32 %v578, 0.2
  %v581 = vmax.f32 %v577, %v579
  %v582 = vmax.f32 %v578, %v580
  %v583 = vsel %vm246, %v581, -1e+30
  %v584 = vsel %vm247, %v582, -1e+30
  %v585 = vsel %vm354, %v583, -inf
  %586 = vmax.xlane.f32.xlu0 %v585
  %v587 = vpop.xlane.xlu0 %586
  %v588 = vsel %vm358, %v584, -inf
  %589 = vmax.xlane.f32.xlu0 %v588
  %v590 = vpop.xlane.xlu0 %589
  %v591 = vsub.f32 %v583, %v587
  %v592 = vsub.f32 %v584, %v590
  %v593 = vmul.f32 %v591, 1.442695
  %v594 = vpow.pop %v593
  %v595 = vmul.f32 %v592, 1.442695
  %v596 = vpow.pop %v595
  %v597 = vsel %vm246, %v594, 0.0
  %v598 = vsel %vm247, %v596, 0.0
  %v599 = vsel %vm354, %v597, 0.0
  %600 = vadd.xlane.f32.xlu0 %v599
  %v601 = vpop.xlane.xlu0 %600
  %v602 = vsel %vm358, %v598, 0.0
  %603 = vadd.xlane.f32.xlu0 %v602
  %v604 = vpop.xlane.xlu0 %603
  %vm605 = vcmp.gt.f32.partialorder %v601, 0.0
  %vm606 = vcmp.gt.f32.partialorder %v604, 0.0
  %v607 = vrcp.pop %v601
  %v608 = vrcp.pop %v604
  %v609 = vsel %vm605, %v607, 0.0
  %v610 = vsel %vm606, %v608, 0.0
  %v613 = vsel %vm354, %v597, 0
  %v616 = vsel %vm354, %v598, 0
  %618 = vmatprep.subr.mxu0 0.0
  %619 = vmatpush1.msra.mxu0 %v497
  %620 = vmatprep.subr.mxu0 0.0
  %621 = vmatpush1.msra.mxu0 0.0
  %622 = vmatprep.subr.mxu0 0.0
  %623 = vmatpush1.msra.mxu0 0.0
  %624 = vmatprep.subr.mxu0 0.0
  %625 = vmatpush1.msra.mxu0 0.0
  %626 = vmatprep.subr.mxu0 0.0
  %627 = vmatpush1.msra.mxu0 0.0
  %628 = vmatprep.subr.mxu0 0.0
  %629 = vmatpush1.msra.mxu0 0.0
  %630 = vmatprep.subr.mxu0 0.0
  %631 = vmatpush1.msra.mxu0 0.0
  %632 = vmatprep.subr.mxu0 0.0
  %633 = vmatpush1.msra.mxu0 0.0
  %634 = vmatprep.subr.mxu0 0.0
  %635 = vmatpush1.msra.mxu0 0.0
  %636 = vmatprep.subr.mxu0 0.0
  %637 = vmatpush1.msra.mxu0 0.0
  %638 = vmatprep.subr.mxu0 0.0
  %639 = vmatpush1.msra.mxu0 0.0
  %640 = vmatprep.subr.mxu0 0.0
  %641 = vmatpush1.msra.mxu0 0.0
  %642 = vmatprep.subr.mxu0 0.0
  %643 = vmatpush1.msra.mxu0 0.0
  %644 = vmatprep.subr.mxu0 0.0
  %645 = vmatpush1.msra.mxu0 0.0
  %646 = vmatprep.subr.mxu0 0.0
  %647 = vmatpush1.msra.mxu0 0.0
  %648 = vmatprep.subr.mxu0 0.0
  %649 = vmatpush1.msra.mxu0 0.0
  %650 = vmatprep.subr.mxu0 0.0
  %651 = vmatpush1.msra.mxu0 0.0
  %652 = vmatprep.subr.mxu0 0.0
  %653 = vmatpush1.msra.mxu0 0.0
  %654 = vmatprep.subr.mxu0 0.0
  %655 = vmatpush1.msra.mxu0 0.0
  %656 = vmatprep.subr.mxu0 0.0
  %657 = vmatpush1.msra.mxu0 0.0
  %658 = vmatprep.subr.mxu0 0.0
  %659 = vmatpush1.msra.mxu0 0.0
  %660 = vmatprep.subr.mxu0 0.0
  %661 = vmatpush1.msra.mxu0 0.0
  %662 = vmatprep.subr.mxu0 0.0
  %663 = vmatpush1.msra.mxu0 0.0
  %664 = vmatprep.subr.mxu0 0.0
  %665 = vmatpush1.msra.mxu0 0.0
  %666 = vmatprep.subr.mxu0 0.0
  %667 = vmatpush1.msra.mxu0 0.0
  %668 = vmatprep.subr.mxu0 0.0
  %669 = vmatpush1.msra.mxu0 0.0
  %670 = vmatprep.subr.mxu0 0.0
  %671 = vmatpush1.msra.mxu0 0.0
  %672 = vmatprep.subr.mxu0 0.0
  %673 = vmatpush1.msra.mxu0 0.0
  %674 = vmatprep.subr.mxu0 0.0
  %675 = vmatpush1.msra.mxu0 0.0
  %676 = vmatprep.subr.mxu0 0.0
  %677 = vmatpush1.msra.mxu0 0.0
  %678 = vmatprep.subr.mxu0 0.0
  %679 = vmatpush1.msra.mxu0 0.0
  %680 = vmatprep.subr.mxu0 0.0
  %681 = vmatpush1.msra.mxu0 0.0
  %682 = vmatprep.mubr.f32.mxu0 0.0
  %683 = vmatmul.mubr.f32.gmra.mrb[0].mxu0 %v613
  %v684 = vpop.f32.mrb[0].mxu0
  %v685 = vadd.f32 0.0, %v684
  %v686 = vpop.f32.mrb[0].mxu0
  %687 = vmatprep.mubr.f32.mxu0 0.0
  %688 = vmatmul.mubr.f32.gmra.mrb[0].mxu0 %v616
  %v689 = vpop.f32.mrb[0].mxu0
  %v690 = vadd.f32 0.0, %v689
  %v691 = vpop.f32.mrb[0].mxu0
  %692 = vdwg.mxu0
  %v693 = vmul.f32 %v685, %v609
  %v694 = vmul.f32 %v690, %v610
  %v695 = vmax.f32 %v693, 0.0
  %v696 = vmax.f32 %v694, 0.0
  %v697 = vld [vmem:[%s10] sm:$0x3]
  %v698 = vld [vmem:[%s11] sm:$0x3]
  %vm699 = vcmp.gt.f32.partialorder %v67, 0.0
  %v700 = vlaneseq
  %v701 = vshrl.u32 %v700, 7
  %v702 = vsub.s32 0, %v701
  %v703 = vrot.slane %v698, %v702
  %v704 = vmul.f32 %v241, %v703
  %v705 = vsel %vm79, %v704, 0.0
  %706 = vadd.xlane.f32.xlu0 %v705
  %v707 = vpop.xlane.xlu0 %706
  %v708 = vlaneseq
  %v709 = vshrl.u32 %v708, 7
  %v710 = vsub.s32 0, %v709
  %v711 = vrot.slane %v697, %v710
  %v713 = vsel %vm79, %v711, 0
  %v716 = vsel %vm79, %v153, 0
  %v719 = vsel %vm79, %v158, 0
  %721 = vmatprep.subr.mxu0 0.0
  %722 = vmatpush1.xpose.msra.mxu0 %v716
  %723 = vmatprep.subr.mxu0 0.0
  %724 = vmatpush1.xpose.msra.mxu0 %v719
  %725 = vmatprep.subr.mxu0 0.0
  %726 = vmatpush1.xpose.msra.mxu0 0.0
  %727 = vmatprep.subr.mxu0 0.0
  %728 = vmatpush1.xpose.msra.mxu0 0.0
  %729 = vmatprep.subr.mxu0 0.0
  %730 = vmatpush1.xpose.msra.mxu0 0.0
  %731 = vmatprep.subr.mxu0 0.0
  %732 = vmatpush1.xpose.msra.mxu0 0.0
  %733 = vmatprep.subr.mxu0 0.0
  %734 = vmatpush1.xpose.msra.mxu0 0.0
  %735 = vmatprep.subr.mxu0 0.0
  %736 = vmatpush1.xpose.msra.mxu0 0.0
  %737 = vmatprep.subr.mxu0 0.0
  %738 = vmatpush1.xpose.msra.mxu0 0.0
  %739 = vmatprep.subr.mxu0 0.0
  %740 = vmatpush1.xpose.msra.mxu0 0.0
  %741 = vmatprep.subr.mxu0 0.0
  %742 = vmatpush1.xpose.msra.mxu0 0.0
  %743 = vmatprep.subr.mxu0 0.0
  %744 = vmatpush1.xpose.msra.mxu0 0.0
  %745 = vmatprep.subr.mxu0 0.0
  %746 = vmatpush1.xpose.msra.mxu0 0.0
  %747 = vmatprep.subr.mxu0 0.0
  %748 = vmatpush1.xpose.msra.mxu0 0.0
  %749 = vmatprep.subr.mxu0 0.0
  %750 = vmatpush1.xpose.msra.mxu0 0.0
  %751 = vmatprep.subr.mxu0 0.0
  %752 = vmatpush1.xpose.msra.mxu0 0.0
  %753 = vmatprep.subr.mxu0 0.0
  %754 = vmatpush1.xpose.msra.mxu0 0.0
  %755 = vmatprep.subr.mxu0 0.0
  %756 = vmatpush1.xpose.msra.mxu0 0.0
  %757 = vmatprep.subr.mxu0 0.0
  %758 = vmatpush1.xpose.msra.mxu0 0.0
  %759 = vmatprep.subr.mxu0 0.0
  %760 = vmatpush1.xpose.msra.mxu0 0.0
  %761 = vmatprep.subr.mxu0 0.0
  %762 = vmatpush1.xpose.msra.mxu0 0.0
  %763 = vmatprep.subr.mxu0 0.0
  %764 = vmatpush1.xpose.msra.mxu0 0.0
  %765 = vmatprep.subr.mxu0 0.0
  %766 = vmatpush1.xpose.msra.mxu0 0.0
  %767 = vmatprep.subr.mxu0 0.0
  %768 = vmatpush1.xpose.msra.mxu0 0.0
  %769 = vmatprep.subr.mxu0 0.0
  %770 = vmatpush1.xpose.msra.mxu0 0.0
  %771 = vmatprep.subr.mxu0 0.0
  %772 = vmatpush1.xpose.msra.mxu0 0.0
  %773 = vmatprep.subr.mxu0 0.0
  %774 = vmatpush1.xpose.msra.mxu0 0.0
  %775 = vmatprep.subr.mxu0 0.0
  %776 = vmatpush1.xpose.msra.mxu0 0.0
  %777 = vmatprep.subr.mxu0 0.0
  %778 = vmatpush1.xpose.msra.mxu0 0.0
  %779 = vmatprep.subr.mxu0 0.0
  %780 = vmatpush1.xpose.msra.mxu0 0.0
  %781 = vmatprep.subr.mxu0 0.0
  %782 = vmatpush1.xpose.msra.mxu0 0.0
  %783 = vmatprep.subr.mxu0 0.0
  %784 = vmatpush1.xpose.msra.mxu0 0.0
  %785 = vmatprep.mubr.f32.mxu0 0.0
  %786 = vmatmul.mubr.f32.gmra.mrb[0].mxu0 %v713
  %v787 = vpop.f32.mrb[0].mxu0
  %v788 = vadd.f32 0.0, %v787
  %v789 = vpop.f32.mrb[0].mxu0
  %790 = vdwg.mxu0
  %v791 = vadd.f32 %v707, %v788
  %v792 = vmul.f32 %v791, 0.2
  %v793 = vmax.f32 %v791, %v792
  %v794 = vsel %vm699, %v793, -1e+30
  %vm795 = vcmask 97280
  %v796 = vsel %vm795, %v794, -inf
  %797 = vmax.xlane.f32.xlu0 %v796
  %v798 = vpop.xlane.xlu0 %797
  %v799 = vsub.f32 %v794, %v798
  %v800 = vmul.f32 %v799, 1.442695
  %v801 = vpow.pop %v800
  %v802 = vsel %vm699, %v801, 0.0
  %v803 = vsel %vm795, %v802, 0.0
  %804 = vadd.xlane.f32.xlu0 %v803
  %v805 = vpop.xlane.xlu0 %804
  %vm806 = vcmp.gt.f32.partialorder %v805, 0.0
  %v807 = vrcp.pop %v805
  %v808 = vsel %vm806, %v807, 0.0
  %v810 = vsel %vm795, %v802, 0
  %vm812 = vcmask 1043456
  %v813 = vsel %vm812, %v158, 0
  %815 = vmatprep.subr.mxu0 0.0
  %816 = vmatpush1.msra.mxu0 %v153
  %817 = vmatprep.subr.mxu0 0.0
  %818 = vmatpush1.msra.mxu0 %v813
  %819 = vmatprep.subr.mxu0 0.0
  %820 = vmatpush1.msra.mxu0 0.0
  %821 = vmatprep.subr.mxu0 0.0
  %822 = vmatpush1.msra.mxu0 0.0
  %823 = vmatprep.subr.mxu0 0.0
  %824 = vmatpush1.msra.mxu0 0.0
  %825 = vmatprep.subr.mxu0 0.0
  %826 = vmatpush1.msra.mxu0 0.0
  %827 = vmatprep.subr.mxu0 0.0
  %828 = vmatpush1.msra.mxu0 0.0
  %829 = vmatprep.subr.mxu0 0.0
  %830 = vmatpush1.msra.mxu0 0.0
  %831 = vmatprep.subr.mxu0 0.0
  %832 = vmatpush1.msra.mxu0 0.0
  %833 = vmatprep.subr.mxu0 0.0
  %834 = vmatpush1.msra.mxu0 0.0
  %835 = vmatprep.subr.mxu0 0.0
  %836 = vmatpush1.msra.mxu0 0.0
  %837 = vmatprep.subr.mxu0 0.0
  %838 = vmatpush1.msra.mxu0 0.0
  %839 = vmatprep.subr.mxu0 0.0
  %840 = vmatpush1.msra.mxu0 0.0
  %841 = vmatprep.subr.mxu0 0.0
  %842 = vmatpush1.msra.mxu0 0.0
  %843 = vmatprep.subr.mxu0 0.0
  %844 = vmatpush1.msra.mxu0 0.0
  %845 = vmatprep.subr.mxu0 0.0
  %846 = vmatpush1.msra.mxu0 0.0
  %847 = vmatprep.subr.mxu0 0.0
  %848 = vmatpush1.msra.mxu0 0.0
  %849 = vmatprep.subr.mxu0 0.0
  %850 = vmatpush1.msra.mxu0 0.0
  %851 = vmatprep.subr.mxu0 0.0
  %852 = vmatpush1.msra.mxu0 0.0
  %853 = vmatprep.subr.mxu0 0.0
  %854 = vmatpush1.msra.mxu0 0.0
  %855 = vmatprep.subr.mxu0 0.0
  %856 = vmatpush1.msra.mxu0 0.0
  %857 = vmatprep.subr.mxu0 0.0
  %858 = vmatpush1.msra.mxu0 0.0
  %859 = vmatprep.subr.mxu0 0.0
  %860 = vmatpush1.msra.mxu0 0.0
  %861 = vmatprep.subr.mxu0 0.0
  %862 = vmatpush1.msra.mxu0 0.0
  %863 = vmatprep.subr.mxu0 0.0
  %864 = vmatpush1.msra.mxu0 0.0
  %865 = vmatprep.subr.mxu0 0.0
  %866 = vmatpush1.msra.mxu0 0.0
  %867 = vmatprep.subr.mxu0 0.0
  %868 = vmatpush1.msra.mxu0 0.0
  %869 = vmatprep.subr.mxu0 0.0
  %870 = vmatpush1.msra.mxu0 0.0
  %871 = vmatprep.subr.mxu0 0.0
  %872 = vmatpush1.msra.mxu0 0.0
  %873 = vmatprep.subr.mxu0 0.0
  %874 = vmatpush1.msra.mxu0 0.0
  %875 = vmatprep.subr.mxu0 0.0
  %876 = vmatpush1.msra.mxu0 0.0
  %877 = vmatprep.subr.mxu0 0.0
  %878 = vmatpush1.msra.mxu0 0.0
  %879 = vmatprep.mubr.f32.mxu0 0.0
  %880 = vmatmul.mubr.f32.gmra.mrb[0].mxu0 %v810
  %v881 = vpop.f32.mrb[0].mxu0
  %v882 = vadd.f32 0.0, %v881
  %v883 = vpop.f32.mrb[0].mxu0
  %884 = vdwg.mxu0
  %v885 = vmul.f32 %v882, %v808
  %v886 = vmax.f32 %v885, 0.0
  %v887 = vlaneseq
  %v888 = vshrl.u32 %v887, 7
  %v889 = vsub.s32 1, %v888
  %v890 = vrot.slane %v698, %v889
  %892 = vrot.lane.b32.xlu0 %v890, 16
  %v893 = vpop.permute.xlu0 %892
  %v895 = vmul.f32 %v241, %v893
  %897 = vrot.lane.b32.xlu0 %v895, 112
  %v898 = vpop.permute.xlu0 %897
  %v900 = vsel %vm79, %v898, 0.0
  %901 = vadd.xlane.f32.xlu0 %v900
  %v902 = vpop.xlane.xlu0 %901
  %v903 = vlaneseq
  %v904 = vshrl.u32 %v903, 7
  %v905 = vsub.s32 1, %v904
  %v906 = vrot.slane %v697, %v905
  %907 = vrot.lane.b32.xlu0 %v153, 112
  %v908 = vpop.permute.xlu0 %907
  %909 = vrot.lane.b32.xlu0 %v158, 112
  %v910 = vpop.permute.xlu0 %909
  %v912 = vsel %vm79, %v906, 0
  %v914 = vsel %vm79, %v908, 0
  %v916 = vsel %vm79, %v910, 0
  %918 = vmatprep.subr.mxu0 0.0
  %919 = vmatpush1.xpose.msra.mxu0 %v914
  %920 = vmatprep.subr.mxu0 0.0
  %921 = vmatpush1.xpose.msra.mxu0 %v916
  %922 = vmatprep.subr.mxu0 0.0
  %923 = vmatpush1.xpose.msra.mxu0 0.0
  %924 = vmatprep.subr.mxu0 0.0
  %925 = vmatpush1.xpose.msra.mxu0 0.0
  %926 = vmatprep.subr.mxu0 0.0
  %927 = vmatpush1.xpose.msra.mxu0 0.0
  %928 = vmatprep.subr.mxu0 0.0
  %929 = vmatpush1.xpose.msra.mxu0 0.0
  %930 = vmatprep.subr.mxu0 0.0
  %931 = vmatpush1.xpose.msra.mxu0 0.0
  %932 = vmatprep.subr.mxu0 0.0
  %933 = vmatpush1.xpose.msra.mxu0 0.0
  %934 = vmatprep.subr.mxu0 0.0
  %935 = vmatpush1.xpose.msra.mxu0 0.0
  %936 = vmatprep.subr.mxu0 0.0
  %937 = vmatpush1.xpose.msra.mxu0 0.0
  %938 = vmatprep.subr.mxu0 0.0
  %939 = vmatpush1.xpose.msra.mxu0 0.0
  %940 = vmatprep.subr.mxu0 0.0
  %941 = vmatpush1.xpose.msra.mxu0 0.0
  %942 = vmatprep.subr.mxu0 0.0
  %943 = vmatpush1.xpose.msra.mxu0 0.0
  %944 = vmatprep.subr.mxu0 0.0
  %945 = vmatpush1.xpose.msra.mxu0 0.0
  %946 = vmatprep.subr.mxu0 0.0
  %947 = vmatpush1.xpose.msra.mxu0 0.0
  %948 = vmatprep.subr.mxu0 0.0
  %949 = vmatpush1.xpose.msra.mxu0 0.0
  %950 = vmatprep.subr.mxu0 0.0
  %951 = vmatpush1.xpose.msra.mxu0 0.0
  %952 = vmatprep.subr.mxu0 0.0
  %953 = vmatpush1.xpose.msra.mxu0 0.0
  %954 = vmatprep.subr.mxu0 0.0
  %955 = vmatpush1.xpose.msra.mxu0 0.0
  %956 = vmatprep.subr.mxu0 0.0
  %957 = vmatpush1.xpose.msra.mxu0 0.0
  %958 = vmatprep.subr.mxu0 0.0
  %959 = vmatpush1.xpose.msra.mxu0 0.0
  %960 = vmatprep.subr.mxu0 0.0
  %961 = vmatpush1.xpose.msra.mxu0 0.0
  %962 = vmatprep.subr.mxu0 0.0
  %963 = vmatpush1.xpose.msra.mxu0 0.0
  %964 = vmatprep.subr.mxu0 0.0
  %965 = vmatpush1.xpose.msra.mxu0 0.0
  %966 = vmatprep.subr.mxu0 0.0
  %967 = vmatpush1.xpose.msra.mxu0 0.0
  %968 = vmatprep.subr.mxu0 0.0
  %969 = vmatpush1.xpose.msra.mxu0 0.0
  %970 = vmatprep.subr.mxu0 0.0
  %971 = vmatpush1.xpose.msra.mxu0 0.0
  %972 = vmatprep.subr.mxu0 0.0
  %973 = vmatpush1.xpose.msra.mxu0 0.0
  %974 = vmatprep.subr.mxu0 0.0
  %975 = vmatpush1.xpose.msra.mxu0 0.0
  %976 = vmatprep.subr.mxu0 0.0
  %977 = vmatpush1.xpose.msra.mxu0 0.0
  %978 = vmatprep.subr.mxu0 0.0
  %979 = vmatpush1.xpose.msra.mxu0 0.0
  %980 = vmatprep.subr.mxu0 0.0
  %981 = vmatpush1.xpose.msra.mxu0 0.0
  %982 = vmatprep.mubr.f32.mxu0 0.0
  %983 = vmatmul.mubr.f32.gmra.mrb[0].mxu0 %v912
  %v984 = vpop.f32.mrb[0].mxu0
  %v985 = vadd.f32 0.0, %v984
  %v986 = vpop.f32.mrb[0].mxu0
  %987 = vdwg.mxu0
  %v988 = vadd.f32 %v902, %v985
  %v989 = vmul.f32 %v988, 0.2
  %v990 = vmax.f32 %v988, %v989
  %v991 = vsel %vm699, %v990, -1e+30
  %v992 = vsel %vm795, %v991, -inf
  %993 = vmax.xlane.f32.xlu0 %v992
  %v994 = vpop.xlane.xlu0 %993
  %v995 = vsub.f32 %v991, %v994
  %v996 = vmul.f32 %v995, 1.442695
  %v997 = vpow.pop %v996
  %v998 = vsel %vm699, %v997, 0.0
  %v999 = vsel %vm795, %v998, 0.0
  %1000 = vadd.xlane.f32.xlu0 %v999
  %v1001 = vpop.xlane.xlu0 %1000
  %vm1002 = vcmp.gt.f32.partialorder %v1001, 0.0
  %v1003 = vrcp.pop %v1001
  %v1004 = vsel %vm1002, %v1003, 0.0
  %v1007 = vsel %vm795, %v998, 0
  %v1009 = vsel %vm812, %v910, 0
  %1011 = vmatprep.subr.mxu0 0.0
  %1012 = vmatpush1.msra.mxu0 %v908
  %1013 = vmatprep.subr.mxu0 0.0
  %1014 = vmatpush1.msra.mxu0 %v1009
  %1015 = vmatprep.subr.mxu0 0.0
  %1016 = vmatpush1.msra.mxu0 0.0
  %1017 = vmatprep.subr.mxu0 0.0
  %1018 = vmatpush1.msra.mxu0 0.0
  %1019 = vmatprep.subr.mxu0 0.0
  %1020 = vmatpush1.msra.mxu0 0.0
  %1021 = vmatprep.subr.mxu0 0.0
  %1022 = vmatpush1.msra.mxu0 0.0
  %1023 = vmatprep.subr.mxu0 0.0
  %1024 = vmatpush1.msra.mxu0 0.0
  %1025 = vmatprep.subr.mxu0 0.0
  %1026 = vmatpush1.msra.mxu0 0.0
  %1027 = vmatprep.subr.mxu0 0.0
  %1028 = vmatpush1.msra.mxu0 0.0
  %1029 = vmatprep.subr.mxu0 0.0
  %1030 = vmatpush1.msra.mxu0 0.0
  %1031 = vmatprep.subr.mxu0 0.0
  %1032 = vmatpush1.msra.mxu0 0.0
  %1033 = vmatprep.subr.mxu0 0.0
  %1034 = vmatpush1.msra.mxu0 0.0
  %1035 = vmatprep.subr.mxu0 0.0
  %1036 = vmatpush1.msra.mxu0 0.0
  %1037 = vmatprep.subr.mxu0 0.0
  %1038 = vmatpush1.msra.mxu0 0.0
  %1039 = vmatprep.subr.mxu0 0.0
  %1040 = vmatpush1.msra.mxu0 0.0
  %1041 = vmatprep.subr.mxu0 0.0
  %1042 = vmatpush1.msra.mxu0 0.0
  %1043 = vmatprep.subr.mxu0 0.0
  %1044 = vmatpush1.msra.mxu0 0.0
  %1045 = vmatprep.subr.mxu0 0.0
  %1046 = vmatpush1.msra.mxu0 0.0
  %1047 = vmatprep.subr.mxu0 0.0
  %1048 = vmatpush1.msra.mxu0 0.0
  %1049 = vmatprep.subr.mxu0 0.0
  %1050 = vmatpush1.msra.mxu0 0.0
  %1051 = vmatprep.subr.mxu0 0.0
  %1052 = vmatpush1.msra.mxu0 0.0
  %1053 = vmatprep.subr.mxu0 0.0
  %1054 = vmatpush1.msra.mxu0 0.0
  %1055 = vmatprep.subr.mxu0 0.0
  %1056 = vmatpush1.msra.mxu0 0.0
  %1057 = vmatprep.subr.mxu0 0.0
  %1058 = vmatpush1.msra.mxu0 0.0
  %1059 = vmatprep.subr.mxu0 0.0
  %1060 = vmatpush1.msra.mxu0 0.0
  %1061 = vmatprep.subr.mxu0 0.0
  %1062 = vmatpush1.msra.mxu0 0.0
  %1063 = vmatprep.subr.mxu0 0.0
  %1064 = vmatpush1.msra.mxu0 0.0
  %1065 = vmatprep.subr.mxu0 0.0
  %1066 = vmatpush1.msra.mxu0 0.0
  %1067 = vmatprep.subr.mxu0 0.0
  %1068 = vmatpush1.msra.mxu0 0.0
  %1069 = vmatprep.subr.mxu0 0.0
  %1070 = vmatpush1.msra.mxu0 0.0
  %1071 = vmatprep.subr.mxu0 0.0
  %1072 = vmatpush1.msra.mxu0 0.0
  %1073 = vmatprep.subr.mxu0 0.0
  %1074 = vmatpush1.msra.mxu0 0.0
  %1075 = vmatprep.mubr.f32.mxu0 0.0
  %1076 = vmatmul.mubr.f32.gmra.mrb[0].mxu0 %v1007
  %v1077 = vpop.f32.mrb[0].mxu0
  %v1078 = vadd.f32 0.0, %v1077
  %v1079 = vpop.f32.mrb[0].mxu0
  %1080 = vdwg.mxu0
  %v1081 = vmul.f32 %v1078, %v1004
  %v1082 = vmax.f32 %v1081, 0.0
  %v1083 = vld [vmem:[%s12] sm:$0xff]
  %v1084 = vld [vmem:[%s12 + $0x8] sm:$0xff]
  %v1085 = vld [vmem:[%s12 + $0x10] sm:$0xff]
  %v1086 = vld [vmem:[%s12 + $0x18] sm:$0xff]
  %v1087 = vld [vmem:[%s14] sm:$0xff]
  %v1088 = vld [vmem:[%s14 + $0x8] sm:$0xff]
  %v1089 = vld [vmem:[%s14 + $0x10] sm:$0xff]
  %v1090 = vld [vmem:[%s14 + $0x18] sm:$0xff]
  %v1091 = vld [vmem:[%s13] sm:$0x1]
  %v1092 = vld [vmem:[%s15] sm:$0x1]
  %vm1093 = vcmp.gt.f32.partialorder %v465, 0.0
  %vm1094 = vcmp.gt.f32.partialorder %v466, 0.0
  %v1095 = vmul.f32 %v465, 1.442695
  %v1096 = vpow.pop %v1095
  %v1097 = vmul.f32 %v466, 1.442695
  %v1098 = vpow.pop %v1097
  %v1099 = vsub.f32 %v1096, 1.0
  %v1100 = vsub.f32 %v1098, 1.0
  %v1101 = vsel %vm1093, %v465, %v1099
  %v1102 = vsel %vm1094, %v466, %v1100
  %v1104 = vsel %vm79, %v1101, 0
  %v1107 = vsel %vm79, %v1102, 0
  %1109 = vmatprep.subr.mxu0 0.0
  %1110 = vmatpush1.msra.mxu0 %v1083
  %1111 = vmatprep.subr.mxu0 0.0
  %1112 = vmatpush1.msra.mxu0 %v1084
  %1113 = vmatprep.subr.mxu0 0.0
  %1114 = vmatpush1.msra.mxu0 0.0
  %1115 = vmatprep.subr.mxu0 0.0
  %1116 = vmatpush1.msra.mxu0 0.0
  %1117 = vmatprep.subr.mxu0 0.0
  %1118 = vmatpush1.msra.mxu0 0.0
  %1119 = vmatprep.subr.mxu0 0.0
  %1120 = vmatpush1.msra.mxu0 0.0
  %1121 = vmatprep.subr.mxu0 0.0
  %1122 = vmatpush1.msra.mxu0 0.0
  %1123 = vmatprep.subr.mxu0 0.0
  %1124 = vmatpush1.msra.mxu0 0.0
  %1125 = vmatprep.subr.mxu0 0.0
  %1126 = vmatpush1.msra.mxu0 0.0
  %1127 = vmatprep.subr.mxu0 0.0
  %1128 = vmatpush1.msra.mxu0 0.0
  %1129 = vmatprep.subr.mxu0 0.0
  %1130 = vmatpush1.msra.mxu0 0.0
  %1131 = vmatprep.subr.mxu0 0.0
  %1132 = vmatpush1.msra.mxu0 0.0
  %1133 = vmatprep.subr.mxu0 0.0
  %1134 = vmatpush1.msra.mxu0 0.0
  %1135 = vmatprep.subr.mxu0 0.0
  %1136 = vmatpush1.msra.mxu0 0.0
  %1137 = vmatprep.subr.mxu0 0.0
  %1138 = vmatpush1.msra.mxu0 0.0
  %1139 = vmatprep.subr.mxu0 0.0
  %1140 = vmatpush1.msra.mxu0 0.0
  %1141 = vmatprep.subr.mxu0 0.0
  %1142 = vmatpush1.msra.mxu0 0.0
  %1143 = vmatprep.subr.mxu0 0.0
  %1144 = vmatpush1.msra.mxu0 0.0
  %1145 = vmatprep.subr.mxu0 0.0
  %1146 = vmatpush1.msra.mxu0 0.0
  %1147 = vmatprep.subr.mxu0 0.0
  %1148 = vmatpush1.msra.mxu0 0.0
  %1149 = vmatprep.subr.mxu0 0.0
  %1150 = vmatpush1.msra.mxu0 0.0
  %1151 = vmatprep.subr.mxu0 0.0
  %1152 = vmatpush1.msra.mxu0 0.0
  %1153 = vmatprep.subr.mxu0 0.0
  %1154 = vmatpush1.msra.mxu0 0.0
  %1155 = vmatprep.subr.mxu0 0.0
  %1156 = vmatpush1.msra.mxu0 0.0
  %1157 = vmatprep.subr.mxu0 0.0
  %1158 = vmatpush1.msra.mxu0 0.0
  %1159 = vmatprep.subr.mxu0 0.0
  %1160 = vmatpush1.msra.mxu0 0.0
  %1161 = vmatprep.subr.mxu0 0.0
  %1162 = vmatpush1.msra.mxu0 0.0
  %1163 = vmatprep.subr.mxu0 0.0
  %1164 = vmatpush1.msra.mxu0 0.0
  %1165 = vmatprep.subr.mxu0 0.0
  %1166 = vmatpush1.msra.mxu0 0.0
  %1167 = vmatprep.subr.mxu0 0.0
  %1168 = vmatpush1.msra.mxu0 0.0
  %1169 = vmatprep.subr.mxu0 0.0
  %1170 = vmatpush1.msra.mxu0 0.0
  %1171 = vmatprep.subr.mxu0 0.0
  %1172 = vmatpush1.msra.mxu0 0.0
  %1173 = vmatprep.mubr.f32.mxu0 0.0
  %1174 = vmatmul.mubr.f32.gmra.mrb[0].mxu0 %v1104
  %v1175 = vpop.f32.mrb[0].mxu0
  %v1176 = vadd.f32 0.0, %v1175
  %v1177 = vpop.f32.mrb[0].mxu0
  %1178 = vmatprep.mubr.f32.mxu0 0.0
  %1179 = vmatmul.mubr.f32.gmra.mrb[0].mxu0 %v1107
  %v1180 = vpop.f32.mrb[0].mxu0
  %v1181 = vadd.f32 0.0, %v1180
  %v1182 = vpop.f32.mrb[0].mxu0
  %1183 = vdwg.mxu0
  %v1185 = vlaneseq
  %v1186 = vshrl.u32 %v1185, 7
  %v1187 = vsub.s32 0, %v1186
  %v1188 = vrot.slane %v1091, %v1187
  %v1190 = vadd.f32 %v1188, %v1176
  %v1191 = vadd.f32 %v1188, %v1181
  %vm1192 = vcmp.gt.f32.partialorder %v886, 0.0
  %v1193 = vmul.f32 %v886, 1.442695
  %v1194 = vpow.pop %v1193
  %v1195 = vsub.f32 %v1194, 1.0
  %v1196 = vsel %vm1192, %v886, %v1195
  %v1198 = vsel %vm79, %v1196, 0
  %1200 = vmatprep.subr.mxu0 0.0
  %1201 = vmatpush1.msra.mxu0 %v1087
  %1202 = vmatprep.subr.mxu0 0.0
  %1203 = vmatpush1.msra.mxu0 %v1088
  %1204 = vmatprep.subr.mxu0 0.0
  %1205 = vmatpush1.msra.mxu0 0.0
  %1206 = vmatprep.subr.mxu0 0.0
  %1207 = vmatpush1.msra.mxu0 0.0
  %1208 = vmatprep.subr.mxu0 0.0
  %1209 = vmatpush1.msra.mxu0 0.0
  %1210 = vmatprep.subr.mxu0 0.0
  %1211 = vmatpush1.msra.mxu0 0.0
  %1212 = vmatprep.subr.mxu0 0.0
  %1213 = vmatpush1.msra.mxu0 0.0
  %1214 = vmatprep.subr.mxu0 0.0
  %1215 = vmatpush1.msra.mxu0 0.0
  %1216 = vmatprep.subr.mxu0 0.0
  %1217 = vmatpush1.msra.mxu0 0.0
  %1218 = vmatprep.subr.mxu0 0.0
  %1219 = vmatpush1.msra.mxu0 0.0
  %1220 = vmatprep.subr.mxu0 0.0
  %1221 = vmatpush1.msra.mxu0 0.0
  %1222 = vmatprep.subr.mxu0 0.0
  %1223 = vmatpush1.msra.mxu0 0.0
  %1224 = vmatprep.subr.mxu0 0.0
  %1225 = vmatpush1.msra.mxu0 0.0
  %1226 = vmatprep.subr.mxu0 0.0
  %1227 = vmatpush1.msra.mxu0 0.0
  %1228 = vmatprep.subr.mxu0 0.0
  %1229 = vmatpush1.msra.mxu0 0.0
  %1230 = vmatprep.subr.mxu0 0.0
  %1231 = vmatpush1.msra.mxu0 0.0
  %1232 = vmatprep.subr.mxu0 0.0
  %1233 = vmatpush1.msra.mxu0 0.0
  %1234 = vmatprep.subr.mxu0 0.0
  %1235 = vmatpush1.msra.mxu0 0.0
  %1236 = vmatprep.subr.mxu0 0.0
  %1237 = vmatpush1.msra.mxu0 0.0
  %1238 = vmatprep.subr.mxu0 0.0
  %1239 = vmatpush1.msra.mxu0 0.0
  %1240 = vmatprep.subr.mxu0 0.0
  %1241 = vmatpush1.msra.mxu0 0.0
  %1242 = vmatprep.subr.mxu0 0.0
  %1243 = vmatpush1.msra.mxu0 0.0
  %1244 = vmatprep.subr.mxu0 0.0
  %1245 = vmatpush1.msra.mxu0 0.0
  %1246 = vmatprep.subr.mxu0 0.0
  %1247 = vmatpush1.msra.mxu0 0.0
  %1248 = vmatprep.subr.mxu0 0.0
  %1249 = vmatpush1.msra.mxu0 0.0
  %1250 = vmatprep.subr.mxu0 0.0
  %1251 = vmatpush1.msra.mxu0 0.0
  %1252 = vmatprep.subr.mxu0 0.0
  %1253 = vmatpush1.msra.mxu0 0.0
  %1254 = vmatprep.subr.mxu0 0.0
  %1255 = vmatpush1.msra.mxu0 0.0
  %1256 = vmatprep.subr.mxu0 0.0
  %1257 = vmatpush1.msra.mxu0 0.0
  %1258 = vmatprep.subr.mxu0 0.0
  %1259 = vmatpush1.msra.mxu0 0.0
  %1260 = vmatprep.subr.mxu0 0.0
  %1261 = vmatpush1.msra.mxu0 0.0
  %1262 = vmatprep.subr.mxu0 0.0
  %1263 = vmatpush1.msra.mxu0 0.0
  %1264 = vmatprep.mubr.f32.mxu0 0.0
  %1265 = vmatmul.mubr.f32.gmra.mrb[0].mxu0 %v1198
  %v1266 = vpop.f32.mrb[0].mxu0
  %v1267 = vadd.f32 0.0, %v1266
  %v1268 = vpop.f32.mrb[0].mxu0
  %1269 = vdwg.mxu0
  %v1271 = vlaneseq
  %v1272 = vshrl.u32 %v1271, 7
  %v1273 = vsub.s32 0, %v1272
  %v1274 = vrot.slane %v1092, %v1273
  %v1276 = vadd.f32 %v1274, %v1267
  %vm1277 = vcmp.gt.f32.partialorder %v695, 0.0
  %vm1278 = vcmp.gt.f32.partialorder %v696, 0.0
  %v1279 = vmul.f32 %v695, 1.442695
  %v1280 = vpow.pop %v1279
  %v1281 = vmul.f32 %v696, 1.442695
  %v1282 = vpow.pop %v1281
  %v1283 = vsub.f32 %v1280, 1.0
  %v1284 = vsub.f32 %v1282, 1.0
  %v1285 = vsel %vm1277, %v695, %v1283
  %v1286 = vsel %vm1278, %v696, %v1284
  %v1288 = vsel %vm79, %v1285, 0
  %v1291 = vsel %vm79, %v1286, 0
  %1293 = vmatprep.subr.mxu0 0.0
  %1294 = vmatpush1.msra.mxu0 %v1085
  %1295 = vmatprep.subr.mxu0 0.0
  %1296 = vmatpush1.msra.mxu0 %v1086
  %1297 = vmatprep.subr.mxu0 0.0
  %1298 = vmatpush1.msra.mxu0 0.0
  %1299 = vmatprep.subr.mxu0 0.0
  %1300 = vmatpush1.msra.mxu0 0.0
  %1301 = vmatprep.subr.mxu0 0.0
  %1302 = vmatpush1.msra.mxu0 0.0
  %1303 = vmatprep.subr.mxu0 0.0
  %1304 = vmatpush1.msra.mxu0 0.0
  %1305 = vmatprep.subr.mxu0 0.0
  %1306 = vmatpush1.msra.mxu0 0.0
  %1307 = vmatprep.subr.mxu0 0.0
  %1308 = vmatpush1.msra.mxu0 0.0
  %1309 = vmatprep.subr.mxu0 0.0
  %1310 = vmatpush1.msra.mxu0 0.0
  %1311 = vmatprep.subr.mxu0 0.0
  %1312 = vmatpush1.msra.mxu0 0.0
  %1313 = vmatprep.subr.mxu0 0.0
  %1314 = vmatpush1.msra.mxu0 0.0
  %1315 = vmatprep.subr.mxu0 0.0
  %1316 = vmatpush1.msra.mxu0 0.0
  %1317 = vmatprep.subr.mxu0 0.0
  %1318 = vmatpush1.msra.mxu0 0.0
  %1319 = vmatprep.subr.mxu0 0.0
  %1320 = vmatpush1.msra.mxu0 0.0
  %1321 = vmatprep.subr.mxu0 0.0
  %1322 = vmatpush1.msra.mxu0 0.0
  %1323 = vmatprep.subr.mxu0 0.0
  %1324 = vmatpush1.msra.mxu0 0.0
  %1325 = vmatprep.subr.mxu0 0.0
  %1326 = vmatpush1.msra.mxu0 0.0
  %1327 = vmatprep.subr.mxu0 0.0
  %1328 = vmatpush1.msra.mxu0 0.0
  %1329 = vmatprep.subr.mxu0 0.0
  %1330 = vmatpush1.msra.mxu0 0.0
  %1331 = vmatprep.subr.mxu0 0.0
  %1332 = vmatpush1.msra.mxu0 0.0
  %1333 = vmatprep.subr.mxu0 0.0
  %1334 = vmatpush1.msra.mxu0 0.0
  %1335 = vmatprep.subr.mxu0 0.0
  %1336 = vmatpush1.msra.mxu0 0.0
  %1337 = vmatprep.subr.mxu0 0.0
  %1338 = vmatpush1.msra.mxu0 0.0
  %1339 = vmatprep.subr.mxu0 0.0
  %1340 = vmatpush1.msra.mxu0 0.0
  %1341 = vmatprep.subr.mxu0 0.0
  %1342 = vmatpush1.msra.mxu0 0.0
  %1343 = vmatprep.subr.mxu0 0.0
  %1344 = vmatpush1.msra.mxu0 0.0
  %1345 = vmatprep.subr.mxu0 0.0
  %1346 = vmatpush1.msra.mxu0 0.0
  %1347 = vmatprep.subr.mxu0 0.0
  %1348 = vmatpush1.msra.mxu0 0.0
  %1349 = vmatprep.subr.mxu0 0.0
  %1350 = vmatpush1.msra.mxu0 0.0
  %1351 = vmatprep.subr.mxu0 0.0
  %1352 = vmatpush1.msra.mxu0 0.0
  %1353 = vmatprep.subr.mxu0 0.0
  %1354 = vmatpush1.msra.mxu0 0.0
  %1355 = vmatprep.subr.mxu0 0.0
  %1356 = vmatpush1.msra.mxu0 0.0
  %1357 = vmatprep.mubr.f32.mxu0 0.0
  %1358 = vmatmul.mubr.f32.gmra.mrb[0].mxu0 %v1288
  %v1359 = vpop.f32.mrb[0].mxu0
  %v1360 = vadd.f32 0.0, %v1359
  %v1361 = vpop.f32.mrb[0].mxu0
  %1362 = vmatprep.mubr.f32.mxu0 0.0
  %1363 = vmatmul.mubr.f32.gmra.mrb[0].mxu0 %v1291
  %v1364 = vpop.f32.mrb[0].mxu0
  %v1365 = vadd.f32 0.0, %v1364
  %v1366 = vpop.f32.mrb[0].mxu0
  %1367 = vdwg.mxu0
  %v1368 = vadd.f32 %v1190, %v1360
  %v1369 = vadd.f32 %v1191, %v1365
  %vm1370 = vcmp.gt.f32.partialorder %v1082, 0.0
  %v1371 = vmul.f32 %v1082, 1.442695
  %v1372 = vpow.pop %v1371
  %v1373 = vsub.f32 %v1372, 1.0
  %v1374 = vsel %vm1370, %v1082, %v1373
  %v1376 = vsel %vm79, %v1374, 0
  %1378 = vmatprep.subr.mxu0 0.0
  %1379 = vmatpush1.msra.mxu0 %v1089
  %1380 = vmatprep.subr.mxu0 0.0
  %1381 = vmatpush1.msra.mxu0 %v1090
  %1382 = vmatprep.subr.mxu0 0.0
  %1383 = vmatpush1.msra.mxu0 0.0
  %1384 = vmatprep.subr.mxu0 0.0
  %1385 = vmatpush1.msra.mxu0 0.0
  %1386 = vmatprep.subr.mxu0 0.0
  %1387 = vmatpush1.msra.mxu0 0.0
  %1388 = vmatprep.subr.mxu0 0.0
  %1389 = vmatpush1.msra.mxu0 0.0
  %1390 = vmatprep.subr.mxu0 0.0
  %1391 = vmatpush1.msra.mxu0 0.0
  %1392 = vmatprep.subr.mxu0 0.0
  %1393 = vmatpush1.msra.mxu0 0.0
  %1394 = vmatprep.subr.mxu0 0.0
  %1395 = vmatpush1.msra.mxu0 0.0
  %1396 = vmatprep.subr.mxu0 0.0
  %1397 = vmatpush1.msra.mxu0 0.0
  %1398 = vmatprep.subr.mxu0 0.0
  %1399 = vmatpush1.msra.mxu0 0.0
  %1400 = vmatprep.subr.mxu0 0.0
  %1401 = vmatpush1.msra.mxu0 0.0
  %1402 = vmatprep.subr.mxu0 0.0
  %1403 = vmatpush1.msra.mxu0 0.0
  %1404 = vmatprep.subr.mxu0 0.0
  %1405 = vmatpush1.msra.mxu0 0.0
  %1406 = vmatprep.subr.mxu0 0.0
  %1407 = vmatpush1.msra.mxu0 0.0
  %1408 = vmatprep.subr.mxu0 0.0
  %1409 = vmatpush1.msra.mxu0 0.0
  %1410 = vmatprep.subr.mxu0 0.0
  %1411 = vmatpush1.msra.mxu0 0.0
  %1412 = vmatprep.subr.mxu0 0.0
  %1413 = vmatpush1.msra.mxu0 0.0
  %1414 = vmatprep.subr.mxu0 0.0
  %1415 = vmatpush1.msra.mxu0 0.0
  %1416 = vmatprep.subr.mxu0 0.0
  %1417 = vmatpush1.msra.mxu0 0.0
  %1418 = vmatprep.subr.mxu0 0.0
  %1419 = vmatpush1.msra.mxu0 0.0
  %1420 = vmatprep.subr.mxu0 0.0
  %1421 = vmatpush1.msra.mxu0 0.0
  %1422 = vmatprep.subr.mxu0 0.0
  %1423 = vmatpush1.msra.mxu0 0.0
  %1424 = vmatprep.subr.mxu0 0.0
  %1425 = vmatpush1.msra.mxu0 0.0
  %1426 = vmatprep.subr.mxu0 0.0
  %1427 = vmatpush1.msra.mxu0 0.0
  %1428 = vmatprep.subr.mxu0 0.0
  %1429 = vmatpush1.msra.mxu0 0.0
  %1430 = vmatprep.subr.mxu0 0.0
  %1431 = vmatpush1.msra.mxu0 0.0
  %1432 = vmatprep.subr.mxu0 0.0
  %1433 = vmatpush1.msra.mxu0 0.0
  %1434 = vmatprep.subr.mxu0 0.0
  %1435 = vmatpush1.msra.mxu0 0.0
  %1436 = vmatprep.subr.mxu0 0.0
  %1437 = vmatpush1.msra.mxu0 0.0
  %1438 = vmatprep.subr.mxu0 0.0
  %1439 = vmatpush1.msra.mxu0 0.0
  %1440 = vmatprep.subr.mxu0 0.0
  %1441 = vmatpush1.msra.mxu0 0.0
  %1442 = vmatprep.mubr.f32.mxu0 0.0
  %1443 = vmatmul.mubr.f32.gmra.mrb[0].mxu0 %v1376
  %v1444 = vpop.f32.mrb[0].mxu0
  %v1445 = vadd.f32 0.0, %v1444
  %v1446 = vpop.f32.mrb[0].mxu0
  %1447 = vdwg.mxu0
  %v1448 = vadd.f32 %v1276, %v1445
  %v1449 = vld [vmem:[%s16] sm:$0x1]
  %v1450 = vld [vmem:[%s17] sm:$0x1]
  %v1452 = vlaneseq
  %v1453 = vshrl.u32 %v1452, 7
  %v1454 = vsub.s32 0, %v1453
  %v1455 = vrot.slane %v1450, %v1454
  %v1457 = vmul.f32 %v1368, %v1455
  %v1458 = vmul.f32 %v1369, %v1455
  %v1459 = vsel %vm79, %v1457, 0.0
  %1460 = vadd.xlane.f32.xlu0 %v1459
  %v1461 = vpop.xlane.xlu0 %1460
  %v1462 = vsel %vm257, %v1458, 0.0
  %1463 = vadd.xlane.f32.xlu0 %v1462
  %v1464 = vpop.xlane.xlu0 %1463
  %v1466 = vlaneseq
  %v1467 = vshrl.u32 %v1466, 7
  %v1468 = vsub.s32 0, %v1467
  %v1469 = vrot.slane %v1449, %v1468
  %v1470 = vsel %vm79, %v1469, 0
  %v1473 = vsel %vm79, %v1448, 0
  %1475 = vmatprep.subr.mxu0 0.0
  %1476 = vmatpush1.xpose.msra.mxu0 %v1473
  %1477 = vmatprep.subr.mxu0 0.0
  %1478 = vmatpush1.xpose.msra.mxu0 0.0
  %1479 = vmatprep.subr.mxu0 0.0
  %1480 = vmatpush1.xpose.msra.mxu0 0.0
  %1481 = vmatprep.subr.mxu0 0.0
  %1482 = vmatpush1.xpose.msra.mxu0 0.0
  %1483 = vmatprep.subr.mxu0 0.0
  %1484 = vmatpush1.xpose.msra.mxu0 0.0
  %1485 = vmatprep.subr.mxu0 0.0
  %1486 = vmatpush1.xpose.msra.mxu0 0.0
  %1487 = vmatprep.subr.mxu0 0.0
  %1488 = vmatpush1.xpose.msra.mxu0 0.0
  %1489 = vmatprep.subr.mxu0 0.0
  %1490 = vmatpush1.xpose.msra.mxu0 0.0
  %1491 = vmatprep.subr.mxu0 0.0
  %1492 = vmatpush1.xpose.msra.mxu0 0.0
  %1493 = vmatprep.subr.mxu0 0.0
  %1494 = vmatpush1.xpose.msra.mxu0 0.0
  %1495 = vmatprep.subr.mxu0 0.0
  %1496 = vmatpush1.xpose.msra.mxu0 0.0
  %1497 = vmatprep.subr.mxu0 0.0
  %1498 = vmatpush1.xpose.msra.mxu0 0.0
  %1499 = vmatprep.subr.mxu0 0.0
  %1500 = vmatpush1.xpose.msra.mxu0 0.0
  %1501 = vmatprep.subr.mxu0 0.0
  %1502 = vmatpush1.xpose.msra.mxu0 0.0
  %1503 = vmatprep.subr.mxu0 0.0
  %1504 = vmatpush1.xpose.msra.mxu0 0.0
  %1505 = vmatprep.subr.mxu0 0.0
  %1506 = vmatpush1.xpose.msra.mxu0 0.0
  %1507 = vmatprep.subr.mxu0 0.0
  %1508 = vmatpush1.xpose.msra.mxu0 0.0
  %1509 = vmatprep.subr.mxu0 0.0
  %1510 = vmatpush1.xpose.msra.mxu0 0.0
  %1511 = vmatprep.subr.mxu0 0.0
  %1512 = vmatpush1.xpose.msra.mxu0 0.0
  %1513 = vmatprep.subr.mxu0 0.0
  %1514 = vmatpush1.xpose.msra.mxu0 0.0
  %1515 = vmatprep.subr.mxu0 0.0
  %1516 = vmatpush1.xpose.msra.mxu0 0.0
  %1517 = vmatprep.subr.mxu0 0.0
  %1518 = vmatpush1.xpose.msra.mxu0 0.0
  %1519 = vmatprep.subr.mxu0 0.0
  %1520 = vmatpush1.xpose.msra.mxu0 0.0
  %1521 = vmatprep.subr.mxu0 0.0
  %1522 = vmatpush1.xpose.msra.mxu0 0.0
  %1523 = vmatprep.subr.mxu0 0.0
  %1524 = vmatpush1.xpose.msra.mxu0 0.0
  %1525 = vmatprep.subr.mxu0 0.0
  %1526 = vmatpush1.xpose.msra.mxu0 0.0
  %1527 = vmatprep.subr.mxu0 0.0
  %1528 = vmatpush1.xpose.msra.mxu0 0.0
  %1529 = vmatprep.subr.mxu0 0.0
  %1530 = vmatpush1.xpose.msra.mxu0 0.0
  %1531 = vmatprep.subr.mxu0 0.0
  %1532 = vmatpush1.xpose.msra.mxu0 0.0
  %1533 = vmatprep.subr.mxu0 0.0
  %1534 = vmatpush1.xpose.msra.mxu0 0.0
  %1535 = vmatprep.subr.mxu0 0.0
  %1536 = vmatpush1.xpose.msra.mxu0 0.0
  %1537 = vmatprep.subr.mxu0 0.0
  %1538 = vmatpush1.xpose.msra.mxu0 0.0
  %1539 = vmatprep.mubr.f32.mxu0 0.0
  %1540 = vmatmul.mubr.f32.gmra.mrb[0].mxu0 %v1470
  %v1541 = vpop.f32.mrb[0].mxu0
  %v1542 = vadd.f32 0.0, %v1541
  %v1543 = vpop.f32.mrb[0].mxu0
  %1544 = vmatprep.mubr.f32.mxu0 0.0
  %1545 = vmatmul.mubr.f32.gmra.mrb[0].mxu0 %v1470
  %v1546 = vpop.f32.mrb[0].mxu0
  %v1547 = vadd.f32 0.0, %v1546
  %v1548 = vpop.f32.mrb[0].mxu0
  %1549 = vdwg.mxu0
  %v1550 = vadd.f32 %v1461, %v1542
  %v1551 = vadd.f32 %v1464, %v1547
  %v1552 = vmul.f32 %v1550, 0.2
  %v1553 = vmul.f32 %v1551, 0.2
  %v1554 = vmax.f32 %v1550, %v1552
  %v1555 = vmax.f32 %v1551, %v1553
  %v1556 = vsel %vm246, %v1554, -1e+30
  %v1557 = vsel %vm247, %v1555, -1e+30
  %v1558 = vsel %vm354, %v1556, -inf
  %1559 = vmax.xlane.f32.xlu0 %v1558
  %v1560 = vpop.xlane.xlu0 %1559
  %v1561 = vsel %vm358, %v1557, -inf
  %1562 = vmax.xlane.f32.xlu0 %v1561
  %v1563 = vpop.xlane.xlu0 %1562
  %v1564 = vsub.f32 %v1556, %v1560
  %v1565 = vsub.f32 %v1557, %v1563
  %v1566 = vmul.f32 %v1564, 1.442695
  %v1567 = vpow.pop %v1566
  %v1568 = vmul.f32 %v1565, 1.442695
  %v1569 = vpow.pop %v1568
  %v1570 = vsel %vm246, %v1567, 0.0
  %v1571 = vsel %vm247, %v1569, 0.0
  %v1572 = vsel %vm354, %v1570, 0.0
  %1573 = vadd.xlane.f32.xlu0 %v1572
  %v1574 = vpop.xlane.xlu0 %1573
  %v1575 = vsel %vm358, %v1571, 0.0
  %1576 = vadd.xlane.f32.xlu0 %v1575
  %v1577 = vpop.xlane.xlu0 %1576
  %vm1578 = vcmp.gt.f32.partialorder %v1574, 0.0
  %vm1579 = vcmp.gt.f32.partialorder %v1577, 0.0
  %v1580 = vrcp.pop %v1574
  %v1581 = vrcp.pop %v1577
  %v1582 = vsel %vm1578, %v1580, 0.0
  %v1583 = vsel %vm1579, %v1581, 0.0
  %v1585 = vsel %vm354, %v1570, 0
  %v1588 = vsel %vm354, %v1571, 0
  %1590 = vmatprep.subr.mxu0 0.0
  %1591 = vmatpush1.msra.mxu0 %v1448
  %1592 = vmatprep.subr.mxu0 0.0
  %1593 = vmatpush1.msra.mxu0 0.0
  %1594 = vmatprep.subr.mxu0 0.0
  %1595 = vmatpush1.msra.mxu0 0.0
  %1596 = vmatprep.subr.mxu0 0.0
  %1597 = vmatpush1.msra.mxu0 0.0
  %1598 = vmatprep.subr.mxu0 0.0
  %1599 = vmatpush1.msra.mxu0 0.0
  %1600 = vmatprep.subr.mxu0 0.0
  %1601 = vmatpush1.msra.mxu0 0.0
  %1602 = vmatprep.subr.mxu0 0.0
  %1603 = vmatpush1.msra.mxu0 0.0
  %1604 = vmatprep.subr.mxu0 0.0
  %1605 = vmatpush1.msra.mxu0 0.0
  %1606 = vmatprep.subr.mxu0 0.0
  %1607 = vmatpush1.msra.mxu0 0.0
  %1608 = vmatprep.subr.mxu0 0.0
  %1609 = vmatpush1.msra.mxu0 0.0
  %1610 = vmatprep.subr.mxu0 0.0
  %1611 = vmatpush1.msra.mxu0 0.0
  %1612 = vmatprep.subr.mxu0 0.0
  %1613 = vmatpush1.msra.mxu0 0.0
  %1614 = vmatprep.subr.mxu0 0.0
  %1615 = vmatpush1.msra.mxu0 0.0
  %1616 = vmatprep.subr.mxu0 0.0
  %1617 = vmatpush1.msra.mxu0 0.0
  %1618 = vmatprep.subr.mxu0 0.0
  %1619 = vmatpush1.msra.mxu0 0.0
  %1620 = vmatprep.subr.mxu0 0.0
  %1621 = vmatpush1.msra.mxu0 0.0
  %1622 = vmatprep.subr.mxu0 0.0
  %1623 = vmatpush1.msra.mxu0 0.0
  %1624 = vmatprep.subr.mxu0 0.0
  %1625 = vmatpush1.msra.mxu0 0.0
  %1626 = vmatprep.subr.mxu0 0.0
  %1627 = vmatpush1.msra.mxu0 0.0
  %1628 = vmatprep.subr.mxu0 0.0
  %1629 = vmatpush1.msra.mxu0 0.0
  %1630 = vmatprep.subr.mxu0 0.0
  %1631 = vmatpush1.msra.mxu0 0.0
  %1632 = vmatprep.subr.mxu0 0.0
  %1633 = vmatpush1.msra.mxu0 0.0
  %1634 = vmatprep.subr.mxu0 0.0
  %1635 = vmatpush1.msra.mxu0 0.0
  %1636 = vmatprep.subr.mxu0 0.0
  %1637 = vmatpush1.msra.mxu0 0.0
  %1638 = vmatprep.subr.mxu0 0.0
  %1639 = vmatpush1.msra.mxu0 0.0
  %1640 = vmatprep.subr.mxu0 0.0
  %1641 = vmatpush1.msra.mxu0 0.0
  %1642 = vmatprep.subr.mxu0 0.0
  %1643 = vmatpush1.msra.mxu0 0.0
  %1644 = vmatprep.subr.mxu0 0.0
  %1645 = vmatpush1.msra.mxu0 0.0
  %1646 = vmatprep.subr.mxu0 0.0
  %1647 = vmatpush1.msra.mxu0 0.0
  %1648 = vmatprep.subr.mxu0 0.0
  %1649 = vmatpush1.msra.mxu0 0.0
  %1650 = vmatprep.subr.mxu0 0.0
  %1651 = vmatpush1.msra.mxu0 0.0
  %1652 = vmatprep.subr.mxu0 0.0
  %1653 = vmatpush1.msra.mxu0 0.0
  %1654 = vmatprep.mubr.f32.mxu0 0.0
  %1655 = vmatmul.mubr.f32.gmra.mrb[0].mxu0 %v1585
  %v1656 = vpop.f32.mrb[0].mxu0
  %v1657 = vadd.f32 0.0, %v1656
  %v1658 = vpop.f32.mrb[0].mxu0
  %1659 = vmatprep.mubr.f32.mxu0 0.0
  %1660 = vmatmul.mubr.f32.gmra.mrb[0].mxu0 %v1588
  %v1661 = vpop.f32.mrb[0].mxu0
  %v1662 = vadd.f32 0.0, %v1661
  %v1663 = vpop.f32.mrb[0].mxu0
  %1664 = vdwg.mxu0
  %v1665 = vmul.f32 %v1657, %v1582
  %v1666 = vmul.f32 %v1662, %v1583
  %v1667 = vmax.f32 %v1665, 0.0
  %v1668 = vmax.f32 %v1666, 0.0
  %v1669 = vld [vmem:[%s18] sm:$0xff]
  %v1670 = vld [vmem:[%s18 + $0x8] sm:$0xff]
  %v1671 = vld [vmem:[%s19] sm:$0x1]
  %v1673 = vsel %vm79, %v1667, 0
  %v1676 = vsel %vm79, %v1668, 0
  %1678 = vmatprep.subr.mxu0 0.0
  %1679 = vmatpush1.msra.mxu0 %v1669
  %1680 = vmatprep.subr.mxu0 0.0
  %1681 = vmatpush1.msra.mxu0 %v1670
  %1682 = vmatprep.subr.mxu0 0.0
  %1683 = vmatpush1.msra.mxu0 0.0
  %1684 = vmatprep.subr.mxu0 0.0
  %1685 = vmatpush1.msra.mxu0 0.0
  %1686 = vmatprep.subr.mxu0 0.0
  %1687 = vmatpush1.msra.mxu0 0.0
  %1688 = vmatprep.subr.mxu0 0.0
  %1689 = vmatpush1.msra.mxu0 0.0
  %1690 = vmatprep.subr.mxu0 0.0
  %1691 = vmatpush1.msra.mxu0 0.0
  %1692 = vmatprep.subr.mxu0 0.0
  %1693 = vmatpush1.msra.mxu0 0.0
  %1694 = vmatprep.subr.mxu0 0.0
  %1695 = vmatpush1.msra.mxu0 0.0
  %1696 = vmatprep.subr.mxu0 0.0
  %1697 = vmatpush1.msra.mxu0 0.0
  %1698 = vmatprep.subr.mxu0 0.0
  %1699 = vmatpush1.msra.mxu0 0.0
  %1700 = vmatprep.subr.mxu0 0.0
  %1701 = vmatpush1.msra.mxu0 0.0
  %1702 = vmatprep.subr.mxu0 0.0
  %1703 = vmatpush1.msra.mxu0 0.0
  %1704 = vmatprep.subr.mxu0 0.0
  %1705 = vmatpush1.msra.mxu0 0.0
  %1706 = vmatprep.subr.mxu0 0.0
  %1707 = vmatpush1.msra.mxu0 0.0
  %1708 = vmatprep.subr.mxu0 0.0
  %1709 = vmatpush1.msra.mxu0 0.0
  %1710 = vmatprep.subr.mxu0 0.0
  %1711 = vmatpush1.msra.mxu0 0.0
  %1712 = vmatprep.subr.mxu0 0.0
  %1713 = vmatpush1.msra.mxu0 0.0
  %1714 = vmatprep.subr.mxu0 0.0
  %1715 = vmatpush1.msra.mxu0 0.0
  %1716 = vmatprep.subr.mxu0 0.0
  %1717 = vmatpush1.msra.mxu0 0.0
  %1718 = vmatprep.subr.mxu0 0.0
  %1719 = vmatpush1.msra.mxu0 0.0
  %1720 = vmatprep.subr.mxu0 0.0
  %1721 = vmatpush1.msra.mxu0 0.0
  %1722 = vmatprep.subr.mxu0 0.0
  %1723 = vmatpush1.msra.mxu0 0.0
  %1724 = vmatprep.subr.mxu0 0.0
  %1725 = vmatpush1.msra.mxu0 0.0
  %1726 = vmatprep.subr.mxu0 0.0
  %1727 = vmatpush1.msra.mxu0 0.0
  %1728 = vmatprep.subr.mxu0 0.0
  %1729 = vmatpush1.msra.mxu0 0.0
  %1730 = vmatprep.subr.mxu0 0.0
  %1731 = vmatpush1.msra.mxu0 0.0
  %1732 = vmatprep.subr.mxu0 0.0
  %1733 = vmatpush1.msra.mxu0 0.0
  %1734 = vmatprep.subr.mxu0 0.0
  %1735 = vmatpush1.msra.mxu0 0.0
  %1736 = vmatprep.subr.mxu0 0.0
  %1737 = vmatpush1.msra.mxu0 0.0
  %1738 = vmatprep.subr.mxu0 0.0
  %1739 = vmatpush1.msra.mxu0 0.0
  %1740 = vmatprep.subr.mxu0 0.0
  %1741 = vmatpush1.msra.mxu0 0.0
  %1742 = vmatprep.mubr.f32.mxu0 0.0
  %1743 = vmatmul.mubr.f32.gmra.mrb[0].mxu0 %v1673
  %v1744 = vpop.f32.mrb[0].mxu0
  %v1745 = vadd.f32 0.0, %v1744
  %v1746 = vpop.f32.mrb[0].mxu0
  %1747 = vmatprep.mubr.f32.mxu0 0.0
  %1748 = vmatmul.mubr.f32.gmra.mrb[0].mxu0 %v1676
  %v1749 = vpop.f32.mrb[0].mxu0
  %v1750 = vadd.f32 0.0, %v1749
  %v1751 = vpop.f32.mrb[0].mxu0
  %1752 = vdwg.mxu0
  %v1754 = vlaneseq
  %v1755 = vshrl.u32 %v1754, 7
  %v1756 = vsub.s32 0, %v1755
  %v1757 = vrot.slane %v1671, %v1756
  %v1759 = vadd.f32 %v1757, %v1745
  %v1760 = vadd.f32 %v1757, %v1750
  %vm1761 = vcmask 39936
  %1762 = vst.msk [vmem:[%s20] sm:$0xff] %vm1761, %v1759
  %vm1763 = vcmask 35840
  %1764 = vst.msk [vmem:[%s20 + $0x8] sm:$0xf] %vm1763, %v1760
  // Predicated region
  $region82: #{han_forward.1} parent=0 // pred_check
    _
  $region83: #{han_forward.1} parent=0 // pred_check_branch
    %1766 = sbr.rel (0) target = $region85
  $region84: #{han_forward.1} parent=0 // pred_region
    _
  $region85: #{han_forward.1} parent=0 // pred_fallthru
    _
  // Predicated region
  $region86: #{han_forward.1} parent=0 // pred_check
    _
  $region87: #{han_forward.1} parent=0 // pred_check_branch
    %1768 = sbr.rel (0) target = $region89
  $region88: #{han_forward.1} parent=0 // pred_region
    _
  $region89: #{han_forward.1} parent=0 // pred_fallthru
    _

</llo_original>
